<compile_context>
chip_gen: v7x
topology: tpu7x:2x2x1
jax: 0.10.0
libtpu: 0.0.40
codegen_flags: <defaults>
</compile_context>

<pallas_src>
import functools

import jax
import jax.numpy as jnp
from jax.experimental import pallas as pl
from jax.experimental.pallas import tpu as pltpu

_LANE = 128
_TILE_CANDIDATES = (2048, 1024, 512, 256, 128, 64, 32, 16, 8)


def _round_up(x, m):
    return ((x + m - 1) // m) * m


def _layernorm(v, gamma, beta, eps=1e-5):
    mu = jnp.mean(v, axis=-1, keepdims=True)
    var = jnp.mean((v - mu) ** 2, axis=-1, keepdims=True)
    return (v - mu) * jax.lax.rsqrt(var + eps) * gamma + beta


def baseline_kernel(x_ref, wmask_ref, gate_ref,
                    wp_ref, bp_ref,              # projector
                    g_bn_ref, b_bn_ref,          # self.bn LayerNorm
                    w1_ref, b1_ref,              # lin[0] Linear
                    w2_ref, b2_ref,              # lin[2] Linear
                    g_ln_ref, b_ln_ref,          # lin[3] LayerNorm
                    wf_ref, bf_ref,              # fc (classes padded to 128 lanes)
                    o_ref):
    bt, T, D = x_ref.shape
    cdt = wp_ref.dtype   # MXU operand dtype (bf16)

    # Masked mean pool BEFORE the projector (mean-pool commutes with the affine
    # projector; fully-masked rows handled exactly via `gate` on the bias below).
    # wmask already carries the 1/max(sum(mask),1) normalization (exact divide,
    # computed in the wrapper). Per-t accumulation: only one (bt, D) f32 slice is
    # live besides the accumulator -- no (bt, T, D) f32 temp is ever materialized.
    # TODO(synk): mean_pool() is not defined in the source file; standard masked
    # mean (sum(x*mask)/clamp(sum(mask),1), all-masked rows -> 0) is assumed.
    pooled = jnp.zeros((bt, D), jnp.float32)
    for t in range(T):   # T is small and static; traced once
        pooled = pooled + x_ref[:, t, :].astype(jnp.float32) * wmask_ref[:, t:t + 1]

    # projector: Linear(D -> H) on pooled rows only (bf16 MXU, f32 accumulate).
    z = jnp.dot(pooled.astype(cdt), wp_ref[...], preferred_element_type=jnp.float32)
    z = z + bp_ref[...] * gate_ref[...]          # gate==0 for fully-masked rows

    # self.bn : LayerNorm(H)
    z = _layernorm(z, g_bn_ref[...], b_bn_ref[...])

    # self.lin : Linear -> ReLU -> Linear -> LayerNorm
    z = jnp.dot(z.astype(cdt), w1_ref[...], preferred_element_type=jnp.float32) + b1_ref[...]
    z = jnp.maximum(z, 0.0)
    z = jnp.dot(z.astype(cdt), w2_ref[...], preferred_element_type=jnp.float32) + b2_ref[...]
    z = _layernorm(z, g_ln_ref[...], b_ln_ref[...])

    # self.fc : Linear(H -> C_pad); padded columns are zero-weight/zero-bias.
    out = jnp.dot(z.astype(cdt), wf_ref[...], preferred_element_type=jnp.float32) + bf_ref[...]
    o_ref[...] = out.astype(o_ref.dtype)


def _vmem_footprint(bt, *, T, D, H, C_pad, x_bytes, w_bytes, out_bytes):
    """Realistic VMEM bytes for one pipelined grid step at batch tile `bt`."""
    x_tiles = 2 * bt * T * D * x_bytes                      # double-buffered x
    m_tiles = 2 * bt * T * 4 + 2 * bt * 4                   # wmask + gate
    weights = 2 * ((D * H + 2 * H * H + H * C_pad) * w_bytes
                   + (7 * H + C_pad) * 4)                   # weights + biases/LN params
    out_tiles = 2 * bt * C_pad * out_bytes                  # double-buffered output
    live = (2 * bt * D + 4 * bt * H) * 4                    # f32 pooling acc + epilogue temps
    return x_tiles + m_tiles + weights + out_tiles + live


def _pick_batch_tile(N, footprint, budget):
    """Largest tile dividing N that fits the budget; prefer grid >= 4 (>=2 steps
    per v7x TensorCore -> DMA/compute overlap), then >= 2, then any fitting tile."""
    fitting = [bt for bt in _TILE_CANDIDATES
               if N % bt == 0 and footprint(bt) <= budget]
    for min_grid in (4, 2):
        for bt in fitting:
            if N // bt >= min_grid:
                return bt
    if fitting:
        return fitting[0]
    return N   # tiny / odd batch: single whole-array block


def _physical_vmem_bytes():
    try:
        return int(pltpu.get_tpu_info().vmem_capacity_bytes)
    except Exception:
        return 64 << 20   # conservative fallback (v7x per-core VMEM)


def baseline_model_v1(x, mask, params, *, batch_tile=None,
                      stream_dtype=jnp.bfloat16,
                      compute_dtype=jnp.bfloat16,
                      out_dtype=jnp.float32,
                      vmem_budget_bytes=None):
    N, T, D = x.shape
    H = params["wp"].shape[1]
    C = params["wf"].shape[1]
    C_pad = max(_round_up(C, _LANE), _LANE)

    x_bytes = jnp.dtype(stream_dtype).itemsize
    w_bytes = jnp.dtype(compute_dtype).itemsize
    out_bytes = jnp.dtype(out_dtype).itemsize

    # Generation-aware VMEM accounting (v7x: 64 MiB physical; v5e/v6e: 128 MiB).
    phys = _physical_vmem_bytes()
    vmem_cap = max(16 << 20, min(int(0.78 * phys), phys - (16 << 20)))
    if vmem_budget_bytes is None:
        vmem_budget_bytes = int(0.6 * vmem_cap)   # headroom for compiler scratch

    footprint = functools.partial(_vmem_footprint, T=T, D=D, H=H, C_pad=C_pad,
                                  x_bytes=x_bytes, w_bytes=w_bytes,
                                  out_bytes=out_bytes)

    if batch_tile is None:
        batch_tile = _pick_batch_tile(N, footprint, vmem_budget_bytes)
    assert N % batch_tile == 0
    grid = (N // batch_tile,)

    # Stream the big tensor in bf16; precompute the exact pooling normalization and
    # the fully-masked-row gate as tiny XLA ops (removes the in-kernel reduction).
    x = x.astype(stream_dtype)
    mask_f = mask.astype(jnp.float32)
    den = jnp.sum(mask_f, axis=1, keepdims=True)          # (N, 1)
    wmask = mask_f / jnp.maximum(den, 1.0)                 # (N, T), exact divide
    gate = (den > 0.0).astype(jnp.float32)                 # (N, 1)

    # bf16 weights on the MXU (f32 accumulation); biases / LN params stay f32.
    wp = params["wp"].astype(compute_dtype)
    w1 = params["w1"].astype(compute_dtype)
    w2 = params["w2"].astype(compute_dtype)
    wf, bf = params["wf"], params["bf"]
    if C_pad != C:
        wf = jnp.pad(wf, ((0, 0), (0, C_pad - C)))
        bf = jnp.pad(bf, ((0, 0), (0, C_pad - C)))
    wf = wf.astype(compute_dtype)

    def full2d(shape):
        return pl.BlockSpec(shape, lambda i: (0, 0))

    in_specs = [
        pl.BlockSpec((batch_tile, T, D), lambda i: (i, 0, 0)),   # x (bf16)
        pl.BlockSpec((batch_tile, T), lambda i: (i, 0)),         # wmask (f32)
        pl.BlockSpec((batch_tile, 1), lambda i: (i, 0)),         # gate  (f32)
        full2d((D, H)), full2d((1, H)),                          # projector
        full2d((1, H)), full2d((1, H)),                          # bn LayerNorm
        full2d((H, H)), full2d((1, H)),                          # lin Linear 1
        full2d((H, H)), full2d((1, H)),                          # lin Linear 2
        full2d((1, H)), full2d((1, H)),                          # lin LayerNorm
        full2d((H, C_pad)), full2d((1, C_pad)),                  # fc (padded)
    ]
    out_spec = pl.BlockSpec((batch_tile, C_pad), lambda i: (i, 0))

    # Advisory cost estimate (2 LayerNorm rsqrt per row; pooling + 4 matmuls).
    weight_bytes = (D * H + 2 * H * H + H * C_pad) * w_bytes + (7 * H + C_pad) * 4
    flops = 2 * N * (T * D + D * H + 2 * H * H + H * C_pad)
    bytes_accessed = (N * T * D * x_bytes + N * T * 4 + N * 4
                      + weight_bytes + N * C_pad * out_bytes)
    cost = pl.CostEstimate(flops=int(flops), transcendentals=int(2 * N),
                           bytes_accessed=int(bytes_accessed))

    vmem_limit = int(1.3 * footprint(batch_tile)) + (4 << 20)
    vmem_limit = max(16 << 20, min(vmem_limit, vmem_cap))

    out = pl.pallas_call(
        baseline_kernel,
        out_shape=jax.ShapeDtypeStruct((N, C_pad), out_dtype),
        grid_spec=pltpu.PrefetchScalarGridSpec(
            num_scalar_prefetch=0,
            grid=grid,
            in_specs=in_specs,
            out_specs=out_spec,
        ),
        compiler_params=pltpu.CompilerParams(
            dimension_semantics=("parallel",),
            vmem_limit_bytes=vmem_limit),
        cost_estimate=cost,
    )(x, wmask, gate,
      wp, params["bp"],
      params["g_bn"], params["b_bn"],
      w1, params["b1"],
      w2, params["b2"],
      params["g_ln"], params["b_ln"],
      wf, bf)

    return out[:, :C]


def init_params(key, input_dim, hidden_dim, num_classes):
    ks = jax.random.split(key, 6)
    scale_p = 1.0 / jnp.sqrt(input_dim)
    scale_h = 1.0 / jnp.sqrt(hidden_dim)
    return {
        # Linear weights stored as (in, out)
        "wp": jax.random.uniform(ks[0], (input_dim, hidden_dim), jnp.float32,
                                 -scale_p, scale_p),
        "bp": jax.random.uniform(ks[1], (1, hidden_dim), jnp.float32,
                                 -scale_p, scale_p),
        "g_bn": jnp.ones((1, hidden_dim), jnp.float32),
        "b_bn": jnp.zeros((1, hidden_dim), jnp.float32),
        "w1": jax.random.uniform(ks[2], (hidden_dim, hidden_dim), jnp.float32,
                                 -scale_h, scale_h),
        "b1": jax.random.uniform(ks[3], (1, hidden_dim), jnp.float32,
                                 -scale_h, scale_h),
        "w2": jax.random.uniform(ks[4], (hidden_dim, hidden_dim), jnp.float32,
                                 -scale_h, scale_h),
        "b2": jnp.zeros((1, hidden_dim), jnp.float32),
        "g_ln": jnp.ones((1, hidden_dim), jnp.float32),
        "b_ln": jnp.zeros((1, hidden_dim), jnp.float32),
        "wf": jax.random.uniform(ks[5], (hidden_dim, num_classes), jnp.float32,
                                 -scale_h, scale_h),
        "bf": jnp.zeros((1, num_classes), jnp.float32),
    }


if __name__ == "__main__":
    # Small shapes consistent with the module: x [N, T, D], mask [N, T]
    N, T, D, H, C = 16, 8, 128, 128, 16

    key = jax.random.PRNGKey(0)
    kx, klen, kp = jax.random.split(key, 3)

    x = jax.random.normal(kx, (N, T, D), jnp.float32)
    # deterministic variable-length mask (at least one valid token per row)
    lengths = jax.random.randint(klen, (N,), 1, T + 1)
    mask = (jnp.arange(T)[None, :] < lengths[:, None]).astype(jnp.float32)

    params = init_params(kp, D, H, C)

    out = baseline_model_v1(x, mask, params)
    out = jax.block_until_ready(out)
    assert out.shape == (N, C)
    assert bool(jnp.all(jnp.isfinite(out)))
    print("KERNEL_OK")
</pallas_src>

<mosaic_0001>
module attributes {stable_mosaic.version = 11 : i64} {
  func.func @baseline_kernel(%arg0: i32, %arg1: memref<8x8x128xbf16, #tpu.memory_space<vmem>>, %arg2: memref<8x8xf32, #tpu.memory_space<vmem>>, %arg3: memref<8x1xf32, #tpu.memory_space<vmem>>, %arg4: memref<128x128xbf16, #tpu.memory_space<vmem>>, %arg5: memref<1x128xf32, #tpu.memory_space<vmem>>, %arg6: memref<1x128xf32, #tpu.memory_space<vmem>>, %arg7: memref<1x128xf32, #tpu.memory_space<vmem>>, %arg8: memref<128x128xbf16, #tpu.memory_space<vmem>>, %arg9: memref<1x128xf32, #tpu.memory_space<vmem>>, %arg10: memref<128x128xbf16, #tpu.memory_space<vmem>>, %arg11: memref<1x128xf32, #tpu.memory_space<vmem>>, %arg12: memref<1x128xf32, #tpu.memory_space<vmem>>, %arg13: memref<1x128xf32, #tpu.memory_space<vmem>>, %arg14: memref<128x128xbf16, #tpu.memory_space<vmem>>, %arg15: memref<1x128xf32, #tpu.memory_space<vmem>>, %arg16: memref<8x128xf32, #tpu.memory_space<vmem>>) attributes {dimension_semantics = [#tpu.dimension_semantics<parallel>], iteration_bounds = array<i64: 2>, scalar_prefetch = 0 : i64, scratch_operands = 0 : i64, tpu.core_type = #tpu.core_type<tc>, window_params = [{transform_indices = @transform_0, window_bounds = array<i64: 8, 8, 128>}, {transform_indices = @transform_1, window_bounds = array<i64: 8, 8>}, {transform_indices = @transform_2, window_bounds = array<i64: 8, 1>}, {pipeline_mode = #tpu.pipeline_mode<synchronous>, transform_indices = @transform_3, window_bounds = array<i64: 128, 128>}, {pipeline_mode = #tpu.pipeline_mode<synchronous>, transform_indices = @transform_4, window_bounds = array<i64: 1, 128>}, {pipeline_mode = #tpu.pipeline_mode<synchronous>, transform_indices = @transform_5, window_bounds = array<i64: 1, 128>}, {pipeline_mode = #tpu.pipeline_mode<synchronous>, transform_indices = @transform_6, window_bounds = array<i64: 1, 128>}, {pipeline_mode = #tpu.pipeline_mode<synchronous>, transform_indices = @transform_7, window_bounds = array<i64: 128, 128>}, {pipeline_mode = #tpu.pipeline_mode<synchronous>, transform_indices = @transform_8, window_bounds = array<i64: 1, 128>}, {pipeline_mode = #tpu.pipeline_mode<synchronous>, transform_indices = @transform_9, window_bounds = array<i64: 128, 128>}, {pipeline_mode = #tpu.pipeline_mode<synchronous>, transform_indices = @transform_10, window_bounds = array<i64: 1, 128>}, {pipeline_mode = #tpu.pipeline_mode<synchronous>, transform_indices = @transform_11, window_bounds = array<i64: 1, 128>}, {pipeline_mode = #tpu.pipeline_mode<synchronous>, transform_indices = @transform_12, window_bounds = array<i64: 1, 128>}, {pipeline_mode = #tpu.pipeline_mode<synchronous>, transform_indices = @transform_13, window_bounds = array<i64: 128, 128>}, {pipeline_mode = #tpu.pipeline_mode<synchronous>, transform_indices = @transform_14, window_bounds = array<i64: 1, 128>}, {transform_indices = @transform_15, window_bounds = array<i64: 8, 128>}]} {
    %cst = arith.constant 0.000000e+00 : f32
    %0 = vector.broadcast %cst : f32 to vector<8x128xf32>
    %c0 = arith.constant 0 : index
    %c0_0 = arith.constant 0 : index
    %c0_1 = arith.constant 0 : index
    %1 = vector.load %arg1[%c0, %c0_0, %c0_1] : memref<8x8x128xbf16, #tpu.memory_space<vmem>>, vector<8x1x128xbf16>
    %2 = vector.shape_cast %1 : vector<8x1x128xbf16> to vector<8x128xbf16>
    %3 = arith.extf %2 : vector<8x128xbf16> to vector<8x128xf32>
    %c0_2 = arith.constant 0 : index
    %c0_3 = arith.constant 0 : index
    %4 = vector.load %arg2[%c0_2, %c0_3] : memref<8x8xf32, #tpu.memory_space<vmem>>, vector<8x1xf32>
    %5 = vector.broadcast %4 : vector<8x1xf32> to vector<8x128xf32>
    %6 = arith.mulf %3, %5 : vector<8x128xf32>
    %7 = arith.addf %0, %6 : vector<8x128xf32>
    %c0_4 = arith.constant 0 : index
    %c1 = arith.constant 1 : index
    %c0_5 = arith.constant 0 : index
    %8 = vector.load %arg1[%c0_4, %c1, %c0_5] : memref<8x8x128xbf16, #tpu.memory_space<vmem>>, vector<8x1x128xbf16>
    %9 = vector.shape_cast %8 : vector<8x1x128xbf16> to vector<8x128xbf16>
    %10 = arith.extf %9 : vector<8x128xbf16> to vector<8x128xf32>
    %c0_6 = arith.constant 0 : index
    %c1_7 = arith.constant 1 : index
    %11 = vector.load %arg2[%c0_6, %c1_7] : memref<8x8xf32, #tpu.memory_space<vmem>>, vector<8x1xf32>
    %12 = vector.broadcast %11 : vector<8x1xf32> to vector<8x128xf32>
    %13 = arith.mulf %10, %12 : vector<8x128xf32>
    %14 = arith.addf %7, %13 : vector<8x128xf32>
    %c0_8 = arith.constant 0 : index
    %c2 = arith.constant 2 : index
    %c0_9 = arith.constant 0 : index
    %15 = vector.load %arg1[%c0_8, %c2, %c0_9] : memref<8x8x128xbf16, #tpu.memory_space<vmem>>, vector<8x1x128xbf16>
    %16 = vector.shape_cast %15 : vector<8x1x128xbf16> to vector<8x128xbf16>
    %17 = arith.extf %16 : vector<8x128xbf16> to vector<8x128xf32>
    %c0_10 = arith.constant 0 : index
    %c2_11 = arith.constant 2 : index
    %18 = vector.load %arg2[%c0_10, %c2_11] : memref<8x8xf32, #tpu.memory_space<vmem>>, vector<8x1xf32>
    %19 = vector.broadcast %18 : vector<8x1xf32> to vector<8x128xf32>
    %20 = arith.mulf %17, %19 : vector<8x128xf32>
    %21 = arith.addf %14, %20 : vector<8x128xf32>
    %c0_12 = arith.constant 0 : index
    %c3 = arith.constant 3 : index
    %c0_13 = arith.constant 0 : index
    %22 = vector.load %arg1[%c0_12, %c3, %c0_13] : memref<8x8x128xbf16, #tpu.memory_space<vmem>>, vector<8x1x128xbf16>
    %23 = vector.shape_cast %22 : vector<8x1x128xbf16> to vector<8x128xbf16>
    %24 = arith.extf %23 : vector<8x128xbf16> to vector<8x128xf32>
    %c0_14 = arith.constant 0 : index
    %c3_15 = arith.constant 3 : index
    %25 = vector.load %arg2[%c0_14, %c3_15] : memref<8x8xf32, #tpu.memory_space<vmem>>, vector<8x1xf32>
    %26 = vector.broadcast %25 : vector<8x1xf32> to vector<8x128xf32>
    %27 = arith.mulf %24, %26 : vector<8x128xf32>
    %28 = arith.addf %21, %27 : vector<8x128xf32>
    %c0_16 = arith.constant 0 : index
    %c4 = arith.constant 4 : index
    %c0_17 = arith.constant 0 : index
    %29 = vector.load %arg1[%c0_16, %c4, %c0_17] : memref<8x8x128xbf16, #tpu.memory_space<vmem>>, vector<8x1x128xbf16>
    %30 = vector.shape_cast %29 : vector<8x1x128xbf16> to vector<8x128xbf16>
    %31 = arith.extf %30 : vector<8x128xbf16> to vector<8x128xf32>
    %c0_18 = arith.constant 0 : index
    %c4_19 = arith.constant 4 : index
    %32 = vector.load %arg2[%c0_18, %c4_19] : memref<8x8xf32, #tpu.memory_space<vmem>>, vector<8x1xf32>
    %33 = vector.broadcast %32 : vector<8x1xf32> to vector<8x128xf32>
    %34 = arith.mulf %31, %33 : vector<8x128xf32>
    %35 = arith.addf %28, %34 : vector<8x128xf32>
    %c0_20 = arith.constant 0 : index
    %c5 = arith.constant 5 : index
    %c0_21 = arith.constant 0 : index
    %36 = vector.load %arg1[%c0_20, %c5, %c0_21] : memref<8x8x128xbf16, #tpu.memory_space<vmem>>, vector<8x1x128xbf16>
    %37 = vector.shape_cast %36 : vector<8x1x128xbf16> to vector<8x128xbf16>
    %38 = arith.extf %37 : vector<8x128xbf16> to vector<8x128xf32>
    %c0_22 = arith.constant 0 : index
    %c5_23 = arith.constant 5 : index
    %39 = vector.load %arg2[%c0_22, %c5_23] : memref<8x8xf32, #tpu.memory_space<vmem>>, vector<8x1xf32>
    %40 = vector.broadcast %39 : vector<8x1xf32> to vector<8x128xf32>
    %41 = arith.mulf %38, %40 : vector<8x128xf32>
    %42 = arith.addf %35, %41 : vector<8x128xf32>
    %c0_24 = arith.constant 0 : index
    %c6 = arith.constant 6 : index
    %c0_25 = arith.constant 0 : index
    %43 = vector.load %arg1[%c0_24, %c6, %c0_25] : memref<8x8x128xbf16, #tpu.memory_space<vmem>>, vector<8x1x128xbf16>
    %44 = vector.shape_cast %43 : vector<8x1x128xbf16> to vector<8x128xbf16>
    %45 = arith.extf %44 : vector<8x128xbf16> to vector<8x128xf32>
    %c0_26 = arith.constant 0 : index
    %c6_27 = arith.constant 6 : index
    %46 = vector.load %arg2[%c0_26, %c6_27] : memref<8x8xf32, #tpu.memory_space<vmem>>, vector<8x1xf32>
    %47 = vector.broadcast %46 : vector<8x1xf32> to vector<8x128xf32>
    %48 = arith.mulf %45, %47 : vector<8x128xf32>
    %49 = arith.addf %42, %48 : vector<8x128xf32>
    %c0_28 = arith.constant 0 : index
    %c7 = arith.constant 7 : index
    %c0_29 = arith.constant 0 : index
    %50 = vector.load %arg1[%c0_28, %c7, %c0_29] : memref<8x8x128xbf16, #tpu.memory_space<vmem>>, vector<8x1x128xbf16>
    %51 = vector.shape_cast %50 : vector<8x1x128xbf16> to vector<8x128xbf16>
    %52 = arith.extf %51 : vector<8x128xbf16> to vector<8x128xf32>
    %c0_30 = arith.constant 0 : index
    %c7_31 = arith.constant 7 : index
    %53 = vector.load %arg2[%c0_30, %c7_31] : memref<8x8xf32, #tpu.memory_space<vmem>>, vector<8x1xf32>
    %54 = vector.broadcast %53 : vector<8x1xf32> to vector<8x128xf32>
    %55 = arith.mulf %52, %54 : vector<8x128xf32>
    %56 = arith.addf %49, %55 : vector<8x128xf32>
    %57 = arith.truncf %56 : vector<8x128xf32> to vector<8x128xbf16>
    %c0_32 = arith.constant 0 : index
    %c0_33 = arith.constant 0 : index
    %58 = vector.load %arg4[%c0_32, %c0_33] : memref<128x128xbf16, #tpu.memory_space<vmem>>, vector<128x128xbf16>
    %cst_34 = arith.constant dense<0.000000e+00> : vector<8x128xf32>
    %59 = tpu.matmul %57, %58, %cst_34 {dimension_numbers = #tpu.dot_dimension_numbers<[1], [0], [0], [1], [0, 0, 1, 1], [], []>} : vector<8x128xbf16>, vector<128x128xbf16>, vector<8x128xf32> -> vector<8x128xf32>
    %c0_35 = arith.constant 0 : index
    %c0_36 = arith.constant 0 : index
    %60 = vector.load %arg5[%c0_35, %c0_36] : memref<1x128xf32, #tpu.memory_space<vmem>>, vector<1x128xf32>
    %c0_37 = arith.constant 0 : index
    %c0_38 = arith.constant 0 : index
    %61 = vector.load %arg3[%c0_37, %c0_38] : memref<8x1xf32, #tpu.memory_space<vmem>>, vector<8x1xf32>
    %62 = vector.broadcast %60 : vector<1x128xf32> to vector<8x128xf32>
    %63 = vector.broadcast %61 : vector<8x1xf32> to vector<8x128xf32>
    %64 = arith.mulf %62, %63 : vector<8x128xf32>
    %65 = arith.addf %59, %64 : vector<8x128xf32>
    %c0_39 = arith.constant 0 : index
    %c0_40 = arith.constant 0 : index
    %66 = vector.load %arg6[%c0_39, %c0_40] : memref<1x128xf32, #tpu.memory_space<vmem>>, vector<1x128xf32>
    %c0_41 = arith.constant 0 : index
    %c0_42 = arith.constant 0 : index
    %67 = vector.load %arg7[%c0_41, %c0_42] : memref<1x128xf32, #tpu.memory_space<vmem>>, vector<1x128xf32>
    %cst_43 = arith.constant dense<0.000000e+00> : vector<8xf32>
    %68 = vector.multi_reduction <add>, %65, %cst_43 [1] : vector<8x128xf32> to vector<8xf32>
    %69 = vector.shape_cast %68 : vector<8xf32> to vector<8x1xf32>
    %cst_44 = arith.constant 1.280000e+02 : f32
    %70 = vector.broadcast %cst_44 : f32 to vector<8x1xf32>
    %71 = arith.divf %69, %70 : vector<8x1xf32>
    %72 = vector.broadcast %71 : vector<8x1xf32> to vector<8x128xf32>
    %73 = arith.subf %65, %72 : vector<8x128xf32>
    %74 = arith.mulf %73, %73 : vector<8x128xf32>
    %cst_45 = arith.constant dense<0.000000e+00> : vector<8xf32>
    %75 = vector.multi_reduction <add>, %74, %cst_45 [1] : vector<8x128xf32> to vector<8xf32>
    %76 = vector.shape_cast %75 : vector<8xf32> to vector<8x1xf32>
    %cst_46 = arith.constant 1.280000e+02 : f32
    %77 = vector.broadcast %cst_46 : f32 to vector<8x1xf32>
    %78 = arith.divf %76, %77 : vector<8x1xf32>
    %79 = vector.broadcast %71 : vector<8x1xf32> to vector<8x128xf32>
    %80 = arith.subf %65, %79 : vector<8x128xf32>
    %cst_47 = arith.constant 9.99999974E-6 : f32
    %81 = vector.broadcast %cst_47 : f32 to vector<8x1xf32>
    %82 = arith.addf %78, %81 : vector<8x1xf32>
    %83 = math.rsqrt %82 : vector<8x1xf32>
    %84 = vector.broadcast %83 : vector<8x1xf32> to vector<8x128xf32>
    %85 = arith.mulf %80, %84 : vector<8x128xf32>
    %86 = vector.broadcast %66 : vector<1x128xf32> to vector<8x128xf32>
    %87 = arith.mulf %85, %86 : vector<8x128xf32>
    %88 = vector.broadcast %67 : vector<1x128xf32> to vector<8x128xf32>
    %89 = arith.addf %87, %88 : vector<8x128xf32>
    %90 = arith.truncf %89 : vector<8x128xf32> to vector<8x128xbf16>
    %c0_48 = arith.constant 0 : index
    %c0_49 = arith.constant 0 : index
    %91 = vector.load %arg8[%c0_48, %c0_49] : memref<128x128xbf16, #tpu.memory_space<vmem>>, vector<128x128xbf16>
    %cst_50 = arith.constant dense<0.000000e+00> : vector<8x128xf32>
    %92 = tpu.matmul %90, %91, %cst_50 {dimension_numbers = #tpu.dot_dimension_numbers<[1], [0], [0], [1], [0, 0, 1, 1], [], []>} : vector<8x128xbf16>, vector<128x128xbf16>, vector<8x128xf32> -> vector<8x128xf32>
    %c0_51 = arith.constant 0 : index
    %c0_52 = arith.constant 0 : index
    %93 = vector.load %arg9[%c0_51, %c0_52] : memref<1x128xf32, #tpu.memory_space<vmem>>, vector<1x128xf32>
    %94 = vector.broadcast %93 : vector<1x128xf32> to vector<8x128xf32>
    %95 = arith.addf %92, %94 : vector<8x128xf32>
    %cst_53 = arith.constant 0.000000e+00 : f32
    %96 = vector.broadcast %cst_53 : f32 to vector<8x128xf32>
    %97 = arith.maximumf %95, %96 : vector<8x128xf32>
    %98 = arith.truncf %97 : vector<8x128xf32> to vector<8x128xbf16>
    %c0_54 = arith.constant 0 : index
    %c0_55 = arith.constant 0 : index
    %99 = vector.load %arg10[%c0_54, %c0_55] : memref<128x128xbf16, #tpu.memory_space<vmem>>, vector<128x128xbf16>
    %cst_56 = arith.constant dense<0.000000e+00> : vector<8x128xf32>
    %100 = tpu.matmul %98, %99, %cst_56 {dimension_numbers = #tpu.dot_dimension_numbers<[1], [0], [0], [1], [0, 0, 1, 1], [], []>} : vector<8x128xbf16>, vector<128x128xbf16>, vector<8x128xf32> -> vector<8x128xf32>
    %c0_57 = arith.constant 0 : index
    %c0_58 = arith.constant 0 : index
    %101 = vector.load %arg11[%c0_57, %c0_58] : memref<1x128xf32, #tpu.memory_space<vmem>>, vector<1x128xf32>
    %102 = vector.broadcast %101 : vector<1x128xf32> to vector<8x128xf32>
    %103 = arith.addf %100, %102 : vector<8x128xf32>
    %c0_59 = arith.constant 0 : index
    %c0_60 = arith.constant 0 : index
    %104 = vector.load %arg12[%c0_59, %c0_60] : memref<1x128xf32, #tpu.memory_space<vmem>>, vector<1x128xf32>
    %c0_61 = arith.constant 0 : index
    %c0_62 = arith.constant 0 : index
    %105 = vector.load %arg13[%c0_61, %c0_62] : memref<1x128xf32, #tpu.memory_space<vmem>>, vector<1x128xf32>
    %cst_63 = arith.constant dense<0.000000e+00> : vector<8xf32>
    %106 = vector.multi_reduction <add>, %103, %cst_63 [1] : vector<8x128xf32> to vector<8xf32>
    %107 = vector.shape_cast %106 : vector<8xf32> to vector<8x1xf32>
    %cst_64 = arith.constant 1.280000e+02 : f32
    %108 = vector.broadcast %cst_64 : f32 to vector<8x1xf32>
    %109 = arith.divf %107, %108 : vector<8x1xf32>
    %110 = vector.broadcast %109 : vector<8x1xf32> to vector<8x128xf32>
    %111 = arith.subf %103, %110 : vector<8x128xf32>
    %112 = arith.mulf %111, %111 : vector<8x128xf32>
    %cst_65 = arith.constant dense<0.000000e+00> : vector<8xf32>
    %113 = vector.multi_reduction <add>, %112, %cst_65 [1] : vector<8x128xf32> to vector<8xf32>
    %114 = vector.shape_cast %113 : vector<8xf32> to vector<8x1xf32>
    %cst_66 = arith.constant 1.280000e+02 : f32
    %115 = vector.broadcast %cst_66 : f32 to vector<8x1xf32>
    %116 = arith.divf %114, %115 : vector<8x1xf32>
    %117 = vector.broadcast %109 : vector<8x1xf32> to vector<8x128xf32>
    %118 = arith.subf %103, %117 : vector<8x128xf32>
    %cst_67 = arith.constant 9.99999974E-6 : f32
    %119 = vector.broadcast %cst_67 : f32 to vector<8x1xf32>
    %120 = arith.addf %116, %119 : vector<8x1xf32>
    %121 = math.rsqrt %120 : vector<8x1xf32>
    %122 = vector.broadcast %121 : vector<8x1xf32> to vector<8x128xf32>
    %123 = arith.mulf %118, %122 : vector<8x128xf32>
    %124 = vector.broadcast %104 : vector<1x128xf32> to vector<8x128xf32>
    %125 = arith.mulf %123, %124 : vector<8x128xf32>
    %126 = vector.broadcast %105 : vector<1x128xf32> to vector<8x128xf32>
    %127 = arith.addf %125, %126 : vector<8x128xf32>
    %128 = arith.truncf %127 : vector<8x128xf32> to vector<8x128xbf16>
    %c0_68 = arith.constant 0 : index
    %c0_69 = arith.constant 0 : index
    %129 = vector.load %arg14[%c0_68, %c0_69] : memref<128x128xbf16, #tpu.memory_space<vmem>>, vector<128x128xbf16>
    %cst_70 = arith.constant dense<0.000000e+00> : vector<8x128xf32>
    %130 = tpu.matmul %128, %129, %cst_70 {dimension_numbers = #tpu.dot_dimension_numbers<[1], [0], [0], [1], [0, 0, 1, 1], [], []>} : vector<8x128xbf16>, vector<128x128xbf16>, vector<8x128xf32> -> vector<8x128xf32>
    %c0_71 = arith.constant 0 : index
    %c0_72 = arith.constant 0 : index
    %131 = vector.load %arg15[%c0_71, %c0_72] : memref<1x128xf32, #tpu.memory_space<vmem>>, vector<1x128xf32>
    %132 = vector.broadcast %131 : vector<1x128xf32> to vector<8x128xf32>
    %133 = arith.addf %130, %132 : vector<8x128xf32>
    %c0_73 = arith.constant 0 : index
    %c0_74 = arith.constant 0 : index
    %134 = vector.load %arg16[%c0_73, %c0_74] : memref<8x128xf32, #tpu.memory_space<vmem>>, vector<8x128xf32>
    tpu.vector_store %arg16[%c0_73, %c0_74], %133 {strides = array<i32>} : memref<8x128xf32, #tpu.memory_space<vmem>>, vector<8x128xf32>,
    return
  }
  func.func @transform_0(%arg0: i32) -> (i32, i32, i32) {
    %c0_i32 = arith.constant 0 : i32
    %c0_i32_0 = arith.constant 0 : i32
    %c0_i32_1 = arith.constant 0 : i32
    return %arg0, %c0_i32, %c0_i32_0 : i32, i32, i32
  }
  func.func @transform_1(%arg0: i32) -> (i32, i32) {
    %c0_i32 = arith.constant 0 : i32
    %c0_i32_0 = arith.constant 0 : i32
    return %arg0, %c0_i32 : i32, i32
  }
  func.func @transform_2(%arg0: i32) -> (i32, i32) {
    %c0_i32 = arith.constant 0 : i32
    %c0_i32_0 = arith.constant 0 : i32
    return %arg0, %c0_i32 : i32, i32
  }
  func.func @transform_3(%arg0: i32) -> (i32, i32) {
    %c0_i32 = arith.constant 0 : i32
    %c0_i32_0 = arith.constant 0 : i32
    %c0_i32_1 = arith.constant 0 : i32
    return %c0_i32, %c0_i32_0 : i32, i32
  }
  func.func @transform_4(%arg0: i32) -> (i32, i32) {
    %c0_i32 = arith.constant 0 : i32
    %c0_i32_0 = arith.constant 0 : i32
    %c0_i32_1 = arith.constant 0 : i32
    return %c0_i32, %c0_i32_0 : i32, i32
  }
  func.func @transform_5(%arg0: i32) -> (i32, i32) {
    %c0_i32 = arith.constant 0 : i32
    %c0_i32_0 = arith.constant 0 : i32
    %c0_i32_1 = arith.constant 0 : i32
    return %c0_i32, %c0_i32_0 : i32, i32
  }
  func.func @transform_6(%arg0: i32) -> (i32, i32) {
    %c0_i32 = arith.constant 0 : i32
    %c0_i32_0 = arith.constant 0 : i32
    %c0_i32_1 = arith.constant 0 : i32
    return %c0_i32, %c0_i32_0 : i32, i32
  }
  func.func @transform_7(%arg0: i32) -> (i32, i32) {
    %c0_i32 = arith.constant 0 : i32
    %c0_i32_0 = arith.constant 0 : i32
    %c0_i32_1 = arith.constant 0 : i32
    return %c0_i32, %c0_i32_0 : i32, i32
  }
  func.func @transform_8(%arg0: i32) -> (i32, i32) {
    %c0_i32 = arith.constant 0 : i32
    %c0_i32_0 = arith.constant 0 : i32
    %c0_i32_1 = arith.constant 0 : i32
    return %c0_i32, %c0_i32_0 : i32, i32
  }
  func.func @transform_9(%arg0: i32) -> (i32, i32) {
    %c0_i32 = arith.constant 0 : i32
    %c0_i32_0 = arith.constant 0 : i32
    %c0_i32_1 = arith.constant 0 : i32
    return %c0_i32, %c0_i32_0 : i32, i32
  }
  func.func @transform_10(%arg0: i32) -> (i32, i32) {
    %c0_i32 = arith.constant 0 : i32
    %c0_i32_0 = arith.constant 0 : i32
    %c0_i32_1 = arith.constant 0 : i32
    return %c0_i32, %c0_i32_0 : i32, i32
  }
  func.func @transform_11(%arg0: i32) -> (i32, i32) {
    %c0_i32 = arith.constant 0 : i32
    %c0_i32_0 = arith.constant 0 : i32
    %c0_i32_1 = arith.constant 0 : i32
    return %c0_i32, %c0_i32_0 : i32, i32
  }
  func.func @transform_12(%arg0: i32) -> (i32, i32) {
    %c0_i32 = arith.constant 0 : i32
    %c0_i32_0 = arith.constant 0 : i32
    %c0_i32_1 = arith.constant 0 : i32
    return %c0_i32, %c0_i32_0 : i32, i32
  }
  func.func @transform_13(%arg0: i32) -> (i32, i32) {
    %c0_i32 = arith.constant 0 : i32
    %c0_i32_0 = arith.constant 0 : i32
    %c0_i32_1 = arith.constant 0 : i32
    return %c0_i32, %c0_i32_0 : i32, i32
  }
  func.func @transform_14(%arg0: i32) -> (i32, i32) {
    %c0_i32 = arith.constant 0 : i32
    %c0_i32_0 = arith.constant 0 : i32
    %c0_i32_1 = arith.constant 0 : i32
    return %c0_i32, %c0_i32_0 : i32, i32
  }
  func.func @transform_15(%arg0: i32) -> (i32, i32) {
    %c0_i32 = arith.constant 0 : i32
    %c0_i32_0 = arith.constant 0 : i32
    return %arg0, %c0_i32 : i32, i32
  }
}

</mosaic_0001>

<llo_original>
// kernel: tpu_custom_call.1
$region0: #{tpu_custom_call.1}
  #allocation0 [shape = 'u32[]', space=smem, size = 0x4, offset = 0x4, fixed_abs, tag = 'smem constant byte address 0x4 - core index']
  #allocation1 [shape = 'u32[144,128]{1,0:T(1,128)}', space=vmem, size = 0x12000, scoped, tag = 'internal scratch']
  %s0 = inlined_call_operand.hbm [shape: bf16[16,8,128], index: 0, kind: input, shape index: {}]
  %s1 = inlined_call_operand.vmem [shape: f32[16,8], index: 1, kind: input, shape index: {}]
  %s2 = inlined_call_operand.vmem [shape: f32[16,1], index: 2, kind: input, shape index: {}]
  %s3 = inlined_call_operand.hbm [shape: bf16[128,128], index: 3, kind: input, shape index: {}]
  %s4 = inlined_call_operand.vmem [shape: f32[1,128], index: 4, kind: input, shape index: {}]
  %s5 = inlined_call_operand.vmem [shape: f32[1,128], index: 5, kind: input, shape index: {}]
  %s6 = inlined_call_operand.vmem [shape: f32[1,128], index: 6, kind: input, shape index: {}]
  %s7 = inlined_call_operand.vmem [shape: bf16[128,128], index: 7, kind: input, shape index: {}]
  %s8 = inlined_call_operand.vmem [shape: f32[1,128], index: 8, kind: input, shape index: {}]
  %s9 = inlined_call_operand.hbm [shape: bf16[128,128], index: 9, kind: input, shape index: {}]
  %s10 = inlined_call_operand.vmem [shape: f32[1,128], index: 10, kind: input, shape index: {}]
  %s11 = inlined_call_operand.vmem [shape: f32[1,128], index: 11, kind: input, shape index: {}]
  %s12 = inlined_call_operand.vmem [shape: f32[1,128], index: 12, kind: input, shape index: {}]
  %s13 = inlined_call_operand.hbm [shape: bf16[128,128], index: 13, kind: input, shape index: {}]
  %s14 = inlined_call_operand.vmem [shape: f32[1,128], index: 14, kind: input, shape index: {}]
  %s15 = inlined_call_operand.hbm [shape: f32[16,128], index: 15, kind: output, shape index: {}]
  %s16 = sld [smem:[#allocation0]]
  $region109: #{tpu_custom_call.1} parent=0
    _
  %s18 = ssub.s32 1, %s16
  %s19 = scalar_select 0, %s18, %s16
  $region1: #{tpu_custom_call.1} parent=0
    #allocation2 [shape = 'u8[32768]{0}', space=vmem, size = 0x8000, scoped, tag = 'input window, operand 0']
    #allocation3 [shape = 's32[2]{0}', space=sflag, size = 0x8, scoped, tag = 'scoped memory for tpu_custom_call.1']
    #allocation4 [shape = 's32[2]{0}', space=sflag, size = 0x8, scoped, tag = 'scoped memory for tpu_custom_call.1']
    #allocation5 [shape = 'u8[32768]{0}', space=vmem, size = 0x8000, scoped, tag = 'input window, operand 3, single buffered']
    #allocation6 [shape = 's32[1]{0}', space=sflag, size = 0x4, scoped, tag = 'scoped memory for tpu_custom_call.1']
    #allocation7 [shape = 'u8[32768]{0}', space=vmem, size = 0x8000, scoped, tag = 'input window, operand 9, single buffered']
    #allocation8 [shape = 'u8[32768]{0}', space=vmem, size = 0x8000, scoped, tag = 'input window, operand 13, single buffered']
    #allocation9 [shape = 's32[1]{0}', space=sflag, size = 0x4, scoped, tag = 'scoped memory for tpu_custom_call.1']
    #allocation10 [shape = 'u8[8192]{0}', space=vmem, size = 0x2000, scoped, tag = 'output window, operand 0']
    %20 = vsyncpa [#allocation3], 0
    %s21 = scalar_lea.sflag [#allocation3], 1
    %22 = vsyncpa %s21, 0
    %23 = vsyncpa [#allocation6], 0
    %24 = vsyncpa [#allocation9], 0
    %25 = vsyncpa [#allocation4], 0
    %s26 = scalar_lea.sflag [#allocation4], 1
    %27 = vsyncpa %s26, 0
    loop: start=0, step=1, limit=4
    $region2: #{tpu_custom_call.1} parent=1 // loop_pre_header
      _
    $region3: #{tpu_custom_call.1} parent=1 // loop_header
      %s29 = sphi 0, %s33
      %p30 = scmp.ge.s32.totalorder %s29, 4
      %s39 = sphi 0, %s41
      %s42 = sphi 0, %s39
      %s43 = sphi 0, %s42
      %s59 = sphi 0, %s43
      %s65 = sphi 0, %s67
      %s68 = sphi 0, %s65
      %s69 = sphi 0, %s68
      %s85 = sphi 0, %s69
      %s91 = sphi 0, %s93
      %s94 = sphi 0, %s91
      %s95 = sphi 0, %s94
      %s111 = sphi 0, %s95
      %s115 = sphi 0, %s115
      %s117 = sphi 0, %s115
      %s118 = sphi 0, %s117
      %s132 = sphi 0, %s118
      %s136 = sphi 0, %s136
      %s138 = sphi 0, %s136
      %s139 = sphi 0, %s138
      %s153 = sphi 0, %s139
      %s157 = sphi 0, %s157
      %s159 = sphi 0, %s157
      %s160 = sphi 0, %s159
      %s174 = sphi 0, %s160
      %s178 = sphi 0, %s178
      %s180 = sphi 0, %s178
      %s181 = sphi 0, %s180
      %s195 = sphi 0, %s181
      %s199 = sphi 0, %s199
      %s201 = sphi 0, %s199
      %s202 = sphi 0, %s201
      %s216 = sphi 0, %s202
      %s220 = sphi 0, %s220
      %s222 = sphi 0, %s220
      %s223 = sphi 0, %s222
      %s237 = sphi 0, %s223
      %s241 = sphi 0, %s241
      %s243 = sphi 0, %s241
      %s244 = sphi 0, %s243
      %s258 = sphi 0, %s244
      %s262 = sphi 0, %s262
      %s264 = sphi 0, %s262
      %s265 = sphi 0, %s264
      %s279 = sphi 0, %s265
      %s283 = sphi 0, %s283
      %s285 = sphi 0, %s283
      %s286 = sphi 0, %s285
      %s300 = sphi 0, %s286
      %s304 = sphi 0, %s304
      %s306 = sphi 0, %s304
      %s307 = sphi 0, %s306
      %s321 = sphi 0, %s307
      %s325 = sphi 0, %s325
      %s327 = sphi 0, %s325
      %s328 = sphi 0, %s327
      %s342 = sphi 0, %s328
      %s346 = sphi 0, %s346
      %s348 = sphi 0, %s346
      %s349 = sphi 0, %s348
      %s363 = sphi 0, %s349
      %s369 = sphi 0, %s371
      %s372 = sphi 0, %s369
      %s373 = sphi 0, %s372
      %s389 = sphi 0, %s373
    $region4: #{tpu_custom_call.1} parent=1 // loop_header_branch
      %32 = sbr.rel (%p30) target = $region8
    $region5: #{tpu_custom_call.1} parent=1 // loop_body
      %s34 = ssub.s32 %s29, 1
      %s35 = ssub.s32 %s29, 2
      %s36 = sadd.s32 %s29, 1
      %s37 = ssub.s32 %s29, %s36
      %p38 = scmp.eq.s32.totalorder %s37, 0
      %s40 = sadd.s32 %s39, 1
      %s41 = scalar_select %p38, %s39, %s40
      %p44 = pneg %p38
      %p45 = scmp.eq.s32.totalorder %s29, 1
      %p46 = por %p44, %p45
      %p47 = scmp.ne.s32.totalorder %s39, %s42
      %p48 = scmp.eq.s32.totalorder %s29, 0
      %p49 = por %p47, %p48
      %p50 = scmp.ne.s32.totalorder %s39, %s42
      %p51 = scmp.eq.s32.totalorder %s34, 1
      %p52 = por %p50, %p51
      %p53 = scmp.ne.s32.totalorder %s42, %s43
      %p54 = scmp.eq.s32.totalorder %s34, 0
      %p55 = por %p53, %p54
      %p56 = scmp.ne.s32.totalorder %s42, %s43
      %p57 = scmp.eq.s32.totalorder %s35, 1
      %p58 = por %p56, %p57
      %p60 = scmp.ne.s32.totalorder %s43, %s59
      %p61 = scmp.eq.s32.totalorder %s35, 0
      %p62 = por %p60, %p61
      %s63 = ssub.s32 %s29, %s36
      %p64 = scmp.eq.s32.totalorder %s63, 0
      %s66 = sadd.s32 %s65, 1
      %s67 = scalar_select %p64, %s65, %s66
      %p70 = pneg %p64
      %p71 = scmp.eq.s32.totalorder %s29, 1
      %p72 = por %p70, %p71
      %p73 = scmp.ne.s32.totalorder %s65, %s68
      %p74 = scmp.eq.s32.totalorder %s29, 0
      %p75 = por %p73, %p74
      %p76 = scmp.ne.s32.totalorder %s65, %s68
      %p77 = scmp.eq.s32.totalorder %s34, 1
      %p78 = por %p76, %p77
      %p79 = scmp.ne.s32.totalorder %s68, %s69
      %p80 = scmp.eq.s32.totalorder %s34, 0
      %p81 = por %p79, %p80
      %p82 = scmp.ne.s32.totalorder %s68, %s69
      %p83 = scmp.eq.s32.totalorder %s35, 1
      %p84 = por %p82, %p83
      %p86 = scmp.ne.s32.totalorder %s69, %s85
      %p87 = scmp.eq.s32.totalorder %s35, 0
      %p88 = por %p86, %p87
      %s89 = ssub.s32 %s29, %s36
      %p90 = scmp.eq.s32.totalorder %s89, 0
      %s92 = sadd.s32 %s91, 1
      %s93 = scalar_select %p90, %s91, %s92
      %p96 = pneg %p90
      %p97 = scmp.eq.s32.totalorder %s29, 1
      %p98 = por %p96, %p97
      %p99 = scmp.ne.s32.totalorder %s91, %s94
      %p100 = scmp.eq.s32.totalorder %s29, 0
      %p101 = por %p99, %p100
      %p102 = scmp.ne.s32.totalorder %s91, %s94
      %p103 = scmp.eq.s32.totalorder %s34, 1
      %p104 = por %p102, %p103
      %p105 = scmp.ne.s32.totalorder %s94, %s95
      %p106 = scmp.eq.s32.totalorder %s34, 0
      %p107 = por %p105, %p106
      %p108 = scmp.ne.s32.totalorder %s94, %s95
      %p109 = scmp.eq.s32.totalorder %s35, 1
      %p110 = por %p108, %p109
      %p112 = scmp.ne.s32.totalorder %s95, %s111
      %p113 = scmp.eq.s32.totalorder %s35, 0
      %p114 = por %p112, %p113
      %s116 = sadd.s32 %s115, 1
      %p119 = scmp.eq.s32.totalorder %s29, 1
      %p120 = scmp.ne.s32.totalorder %s115, %s117
      %p121 = scmp.eq.s32.totalorder %s29, 0
      %p122 = por %p120, %p121
      %p123 = scmp.ne.s32.totalorder %s115, %s117
      %p124 = scmp.eq.s32.totalorder %s34, 1
      %p125 = por %p123, %p124
      %p126 = scmp.ne.s32.totalorder %s117, %s118
      %p127 = scmp.eq.s32.totalorder %s34, 0
      %p128 = por %p126, %p127
      %p129 = scmp.ne.s32.totalorder %s117, %s118
      %p130 = scmp.eq.s32.totalorder %s35, 1
      %p131 = por %p129, %p130
      %p133 = scmp.ne.s32.totalorder %s118, %s132
      %p134 = scmp.eq.s32.totalorder %s35, 0
      %p135 = por %p133, %p134
      %s137 = sadd.s32 %s136, 1
      %p140 = scmp.eq.s32.totalorder %s29, 1
      %p141 = scmp.ne.s32.totalorder %s136, %s138
      %p142 = scmp.eq.s32.totalorder %s29, 0
      %p143 = por %p141, %p142
      %p144 = scmp.ne.s32.totalorder %s136, %s138
      %p145 = scmp.eq.s32.totalorder %s34, 1
      %p146 = por %p144, %p145
      %p147 = scmp.ne.s32.totalorder %s138, %s139
      %p148 = scmp.eq.s32.totalorder %s34, 0
      %p149 = por %p147, %p148
      %p150 = scmp.ne.s32.totalorder %s138, %s139
      %p151 = scmp.eq.s32.totalorder %s35, 1
      %p152 = por %p150, %p151
      %p154 = scmp.ne.s32.totalorder %s139, %s153
      %p155 = scmp.eq.s32.totalorder %s35, 0
      %p156 = por %p154, %p155
      %s158 = sadd.s32 %s157, 1
      %p161 = scmp.eq.s32.totalorder %s29, 1
      %p162 = scmp.ne.s32.totalorder %s157, %s159
      %p163 = scmp.eq.s32.totalorder %s29, 0
      %p164 = por %p162, %p163
      %p165 = scmp.ne.s32.totalorder %s157, %s159
      %p166 = scmp.eq.s32.totalorder %s34, 1
      %p167 = por %p165, %p166
      %p168 = scmp.ne.s32.totalorder %s159, %s160
      %p169 = scmp.eq.s32.totalorder %s34, 0
      %p170 = por %p168, %p169
      %p171 = scmp.ne.s32.totalorder %s159, %s160
      %p172 = scmp.eq.s32.totalorder %s35, 1
      %p173 = por %p171, %p172
      %p175 = scmp.ne.s32.totalorder %s160, %s174
      %p176 = scmp.eq.s32.totalorder %s35, 0
      %p177 = por %p175, %p176
      %s179 = sadd.s32 %s178, 1
      %p182 = scmp.eq.s32.totalorder %s29, 1
      %p183 = scmp.ne.s32.totalorder %s178, %s180
      %p184 = scmp.eq.s32.totalorder %s29, 0
      %p185 = por %p183, %p184
      %p186 = scmp.ne.s32.totalorder %s178, %s180
      %p187 = scmp.eq.s32.totalorder %s34, 1
      %p188 = por %p186, %p187
      %p189 = scmp.ne.s32.totalorder %s180, %s181
      %p190 = scmp.eq.s32.totalorder %s34, 0
      %p191 = por %p189, %p190
      %p192 = scmp.ne.s32.totalorder %s180, %s181
      %p193 = scmp.eq.s32.totalorder %s35, 1
      %p194 = por %p192, %p193
      %p196 = scmp.ne.s32.totalorder %s181, %s195
      %p197 = scmp.eq.s32.totalorder %s35, 0
      %p198 = por %p196, %p197
      %s200 = sadd.s32 %s199, 1
      %p203 = scmp.eq.s32.totalorder %s29, 1
      %p204 = scmp.ne.s32.totalorder %s199, %s201
      %p205 = scmp.eq.s32.totalorder %s29, 0
      %p206 = por %p204, %p205
      %p207 = scmp.ne.s32.totalorder %s199, %s201
      %p208 = scmp.eq.s32.totalorder %s34, 1
      %p209 = por %p207, %p208
      %p210 = scmp.ne.s32.totalorder %s201, %s202
      %p211 = scmp.eq.s32.totalorder %s34, 0
      %p212 = por %p210, %p211
      %p213 = scmp.ne.s32.totalorder %s201, %s202
      %p214 = scmp.eq.s32.totalorder %s35, 1
      %p215 = por %p213, %p214
      %p217 = scmp.ne.s32.totalorder %s202, %s216
      %p218 = scmp.eq.s32.totalorder %s35, 0
      %p219 = por %p217, %p218
      %s221 = sadd.s32 %s220, 1
      %p224 = scmp.eq.s32.totalorder %s29, 1
      %p225 = scmp.ne.s32.totalorder %s220, %s222
      %p226 = scmp.eq.s32.totalorder %s29, 0
      %p227 = por %p225, %p226
      %p228 = scmp.ne.s32.totalorder %s220, %s222
      %p229 = scmp.eq.s32.totalorder %s34, 1
      %p230 = por %p228, %p229
      %p231 = scmp.ne.s32.totalorder %s222, %s223
      %p232 = scmp.eq.s32.totalorder %s34, 0
      %p233 = por %p231, %p232
      %p234 = scmp.ne.s32.totalorder %s222, %s223
      %p235 = scmp.eq.s32.totalorder %s35, 1
      %p236 = por %p234, %p235
      %p238 = scmp.ne.s32.totalorder %s223, %s237
      %p239 = scmp.eq.s32.totalorder %s35, 0
      %p240 = por %p238, %p239
      %s242 = sadd.s32 %s241, 1
      %p245 = scmp.eq.s32.totalorder %s29, 1
      %p246 = scmp.ne.s32.totalorder %s241, %s243
      %p247 = scmp.eq.s32.totalorder %s29, 0
      %p248 = por %p246, %p247
      %p249 = scmp.ne.s32.totalorder %s241, %s243
      %p250 = scmp.eq.s32.totalorder %s34, 1
      %p251 = por %p249, %p250
      %p252 = scmp.ne.s32.totalorder %s243, %s244
      %p253 = scmp.eq.s32.totalorder %s34, 0
      %p254 = por %p252, %p253
      %p255 = scmp.ne.s32.totalorder %s243, %s244
      %p256 = scmp.eq.s32.totalorder %s35, 1
      %p257 = por %p255, %p256
      %p259 = scmp.ne.s32.totalorder %s244, %s258
      %p260 = scmp.eq.s32.totalorder %s35, 0
      %p261 = por %p259, %p260
      %s263 = sadd.s32 %s262, 1
      %p266 = scmp.eq.s32.totalorder %s29, 1
      %p267 = scmp.ne.s32.totalorder %s262, %s264
      %p268 = scmp.eq.s32.totalorder %s29, 0
      %p269 = por %p267, %p268
      %p270 = scmp.ne.s32.totalorder %s262, %s264
      %p271 = scmp.eq.s32.totalorder %s34, 1
      %p272 = por %p270, %p271
      %p273 = scmp.ne.s32.totalorder %s264, %s265
      %p274 = scmp.eq.s32.totalorder %s34, 0
      %p275 = por %p273, %p274
      %p276 = scmp.ne.s32.totalorder %s264, %s265
      %p277 = scmp.eq.s32.totalorder %s35, 1
      %p278 = por %p276, %p277
      %p280 = scmp.ne.s32.totalorder %s265, %s279
      %p281 = scmp.eq.s32.totalorder %s35, 0
      %p282 = por %p280, %p281
      %s284 = sadd.s32 %s283, 1
      %p287 = scmp.eq.s32.totalorder %s29, 1
      %p288 = scmp.ne.s32.totalorder %s283, %s285
      %p289 = scmp.eq.s32.totalorder %s29, 0
      %p290 = por %p288, %p289
      %p291 = scmp.ne.s32.totalorder %s283, %s285
      %p292 = scmp.eq.s32.totalorder %s34, 1
      %p293 = por %p291, %p292
      %p294 = scmp.ne.s32.totalorder %s285, %s286
      %p295 = scmp.eq.s32.totalorder %s34, 0
      %p296 = por %p294, %p295
      %p297 = scmp.ne.s32.totalorder %s285, %s286
      %p298 = scmp.eq.s32.totalorder %s35, 1
      %p299 = por %p297, %p298
      %p301 = scmp.ne.s32.totalorder %s286, %s300
      %p302 = scmp.eq.s32.totalorder %s35, 0
      %p303 = por %p301, %p302
      %s305 = sadd.s32 %s304, 1
      %p308 = scmp.eq.s32.totalorder %s29, 1
      %p309 = scmp.ne.s32.totalorder %s304, %s306
      %p310 = scmp.eq.s32.totalorder %s29, 0
      %p311 = por %p309, %p310
      %p312 = scmp.ne.s32.totalorder %s304, %s306
      %p313 = scmp.eq.s32.totalorder %s34, 1
      %p314 = por %p312, %p313
      %p315 = scmp.ne.s32.totalorder %s306, %s307
      %p316 = scmp.eq.s32.totalorder %s34, 0
      %p317 = por %p315, %p316
      %p318 = scmp.ne.s32.totalorder %s306, %s307
      %p319 = scmp.eq.s32.totalorder %s35, 1
      %p320 = por %p318, %p319
      %p322 = scmp.ne.s32.totalorder %s307, %s321
      %p323 = scmp.eq.s32.totalorder %s35, 0
      %p324 = por %p322, %p323
      %s326 = sadd.s32 %s325, 1
      %p329 = scmp.eq.s32.totalorder %s29, 1
      %p330 = scmp.ne.s32.totalorder %s325, %s327
      %p331 = scmp.eq.s32.totalorder %s29, 0
      %p332 = por %p330, %p331
      %p333 = scmp.ne.s32.totalorder %s325, %s327
      %p334 = scmp.eq.s32.totalorder %s34, 1
      %p335 = por %p333, %p334
      %p336 = scmp.ne.s32.totalorder %s327, %s328
      %p337 = scmp.eq.s32.totalorder %s34, 0
      %p338 = por %p336, %p337
      %p339 = scmp.ne.s32.totalorder %s327, %s328
      %p340 = scmp.eq.s32.totalorder %s35, 1
      %p341 = por %p339, %p340
      %p343 = scmp.ne.s32.totalorder %s328, %s342
      %p344 = scmp.eq.s32.totalorder %s35, 0
      %p345 = por %p343, %p344
      %s347 = sadd.s32 %s346, 1
      %p350 = scmp.eq.s32.totalorder %s29, 1
      %p351 = scmp.ne.s32.totalorder %s346, %s348
      %p352 = scmp.eq.s32.totalorder %s29, 0
      %p353 = por %p351, %p352
      %p354 = scmp.ne.s32.totalorder %s346, %s348
      %p355 = scmp.eq.s32.totalorder %s34, 1
      %p356 = por %p354, %p355
      %p357 = scmp.ne.s32.totalorder %s348, %s349
      %p358 = scmp.eq.s32.totalorder %s34, 0
      %p359 = por %p357, %p358
      %p360 = scmp.ne.s32.totalorder %s348, %s349
      %p361 = scmp.eq.s32.totalorder %s35, 1
      %p362 = por %p360, %p361
      %p364 = scmp.ne.s32.totalorder %s349, %s363
      %p365 = scmp.eq.s32.totalorder %s35, 0
      %p366 = por %p364, %p365
      %s367 = ssub.s32 %s29, %s36
      %p368 = scmp.eq.s32.totalorder %s367, 0
      %s370 = sadd.s32 %s369, 1
      %s371 = scalar_select %p368, %s369, %s370
      %p374 = pneg %p368
      %p375 = scmp.eq.s32.totalorder %s29, 1
      %p376 = por %p374, %p375
      %p377 = scmp.ne.s32.totalorder %s369, %s372
      %p378 = scmp.eq.s32.totalorder %s29, 0
      %p379 = por %p377, %p378
      %p380 = scmp.ne.s32.totalorder %s369, %s372
      %p381 = scmp.eq.s32.totalorder %s34, 1
      %p382 = por %p380, %p381
      %p383 = scmp.ne.s32.totalorder %s372, %s373
      %p384 = scmp.eq.s32.totalorder %s34, 0
      %p385 = por %p383, %p384
      %p386 = scmp.ne.s32.totalorder %s372, %s373
      %p387 = scmp.eq.s32.totalorder %s35, 1
      %p388 = por %p386, %p387
      %p390 = scmp.ne.s32.totalorder %s373, %s389
      %p391 = scmp.eq.s32.totalorder %s35, 0
      %p392 = por %p390, %p391
      %p393 = scmp.le.s32.totalorder 1, %s29
      %p394 = scmp.lt.s32.totalorder %s29, 3
      %p395 = pnand %p393, %p394
      %p396 = pneg %p395
      // Predicated region
      $region9: #{tpu_custom_call.1} parent=5 // pred_check
        _
      $region10: #{tpu_custom_call.1} parent=5 // pred_check_branch
        %398 = sbr.rel (%p395) target = $region12
      $region11: #{tpu_custom_call.1} parent=5 // pred_region
        %s399 = ssub.s32 %s29, 1
        // Predicated region
        $region13: #{tpu_custom_call.1} parent=11 // pred_check
          %p400 = pneg %p128
        $region14: #{tpu_custom_call.1} parent=11 // pred_check_branch
          %402 = sbr.rel (%p400) target = $region16
        $region15: #{tpu_custom_call.1} parent=11 // pred_region
          %s404 = ssub.s32 1024, 1024
          %405 = vsyncadd [#allocation6], %s404
          %s406 = sshll.u32 [#allocation5], 4
          %s407 = int_to_ptr.vmem [resolvable:$true] %s406
          %412 = dma.hbm_to_vmem [thread:$0]  %s3, 1024, %s407, [#allocation6], 64, 64, 4
        $region16: #{tpu_custom_call.1} parent=11 // pred_fallthru
          _
        // Predicated region
        $region17: #{tpu_custom_call.1} parent=11 // pred_check
          %p413 = pneg %p149
        $region18: #{tpu_custom_call.1} parent=11 // pred_check_branch
          %415 = sbr.rel (%p413) target = $region20
        $region19: #{tpu_custom_call.1} parent=11 // pred_region
          _
        $region20: #{tpu_custom_call.1} parent=11 // pred_fallthru
          _
        // Predicated region
        $region21: #{tpu_custom_call.1} parent=11 // pred_check
          %p416 = pneg %p170
        $region22: #{tpu_custom_call.1} parent=11 // pred_check_branch
          %418 = sbr.rel (%p416) target = $region24
        $region23: #{tpu_custom_call.1} parent=11 // pred_region
          _
        $region24: #{tpu_custom_call.1} parent=11 // pred_fallthru
          _
        // Predicated region
        $region25: #{tpu_custom_call.1} parent=11 // pred_check
          %p419 = pneg %p191
        $region26: #{tpu_custom_call.1} parent=11 // pred_check_branch
          %421 = sbr.rel (%p419) target = $region28
        $region27: #{tpu_custom_call.1} parent=11 // pred_region
          _
        $region28: #{tpu_custom_call.1} parent=11 // pred_fallthru
          _
        // Predicated region
        $region29: #{tpu_custom_call.1} parent=11 // pred_check
          %p422 = pneg %p212
        $region30: #{tpu_custom_call.1} parent=11 // pred_check_branch
          %424 = sbr.rel (%p422) target = $region32
        $region31: #{tpu_custom_call.1} parent=11 // pred_region
          _
        $region32: #{tpu_custom_call.1} parent=11 // pred_fallthru
          _
        // Predicated region
        $region33: #{tpu_custom_call.1} parent=11 // pred_check
          %p425 = pneg %p233
        $region34: #{tpu_custom_call.1} parent=11 // pred_check_branch
          %427 = sbr.rel (%p425) target = $region36
        $region35: #{tpu_custom_call.1} parent=11 // pred_region
          _
        $region36: #{tpu_custom_call.1} parent=11 // pred_fallthru
          _
        // Predicated region
        $region37: #{tpu_custom_call.1} parent=11 // pred_check
          %p428 = pneg %p254
        $region38: #{tpu_custom_call.1} parent=11 // pred_check_branch
          %430 = sbr.rel (%p428) target = $region40
        $region39: #{tpu_custom_call.1} parent=11 // pred_region
          %s432 = ssub.s32 1024, 1024
          %433 = vsyncadd [#allocation6], %s432
          %s434 = sshll.u32 [#allocation7], 4
          %s435 = int_to_ptr.vmem [resolvable:$true] %s434
          %440 = dma.hbm_to_vmem [thread:$0]  %s9, 1024, %s435, [#allocation6], 64, 64, 4
        $region40: #{tpu_custom_call.1} parent=11 // pred_fallthru
          _
        // Predicated region
        $region41: #{tpu_custom_call.1} parent=11 // pred_check
          %p441 = pneg %p275
        $region42: #{tpu_custom_call.1} parent=11 // pred_check_branch
          %443 = sbr.rel (%p441) target = $region44
        $region43: #{tpu_custom_call.1} parent=11 // pred_region
          _
        $region44: #{tpu_custom_call.1} parent=11 // pred_fallthru
          _
        // Predicated region
        $region45: #{tpu_custom_call.1} parent=11 // pred_check
          %p444 = pneg %p296
        $region46: #{tpu_custom_call.1} parent=11 // pred_check_branch
          %446 = sbr.rel (%p444) target = $region48
        $region47: #{tpu_custom_call.1} parent=11 // pred_region
          _
        $region48: #{tpu_custom_call.1} parent=11 // pred_fallthru
          _
        // Predicated region
        $region49: #{tpu_custom_call.1} parent=11 // pred_check
          %p447 = pneg %p317
        $region50: #{tpu_custom_call.1} parent=11 // pred_check_branch
          %449 = sbr.rel (%p447) target = $region52
        $region51: #{tpu_custom_call.1} parent=11 // pred_region
          _
        $region52: #{tpu_custom_call.1} parent=11 // pred_fallthru
          _
        // Predicated region
        $region53: #{tpu_custom_call.1} parent=11 // pred_check
          %p450 = pneg %p338
        $region54: #{tpu_custom_call.1} parent=11 // pred_check_branch
          %452 = sbr.rel (%p450) target = $region56
        $region55: #{tpu_custom_call.1} parent=11 // pred_region
          %s454 = ssub.s32 1024, 1024
          %455 = vsyncadd [#allocation9], %s454
          %s456 = sshll.u32 [#allocation8], 4
          %s457 = int_to_ptr.vmem [resolvable:$true] %s456
          %462 = dma.hbm_to_vmem [thread:$0]  %s13, 1024, %s457, [#allocation9], 64, 64, 4
        $region56: #{tpu_custom_call.1} parent=11 // pred_fallthru
          _
        // Predicated region
        $region57: #{tpu_custom_call.1} parent=11 // pred_check
          %p463 = pneg %p359
        $region58: #{tpu_custom_call.1} parent=11 // pred_check_branch
          %465 = sbr.rel (%p463) target = $region60
        $region59: #{tpu_custom_call.1} parent=11 // pred_region
          _
        $region60: #{tpu_custom_call.1} parent=11 // pred_fallthru
          _
      $region12: #{tpu_custom_call.1} parent=5 // pred_fallthru
        _
      %p466 = scmp.lt.s32.totalorder %s29, 2
      // Predicated region
      $region61: #{tpu_custom_call.1} parent=5 // pred_check
        %p467 = pneg %p466
      $region62: #{tpu_custom_call.1} parent=5 // pred_check_branch
        %469 = sbr.rel (%p467) target = $region64
      $region63: #{tpu_custom_call.1} parent=5 // pred_region
        // Predicated region
        $region65: #{tpu_custom_call.1} parent=63 // pred_check
          %p470 = pneg %p49
        $region66: #{tpu_custom_call.1} parent=63 // pred_check_branch
          %472 = sbr.rel (%p470) target = $region68
        $region67: #{tpu_custom_call.1} parent=63 // pred_region
          %s473 = sand.u32 %s39, 1
          %s474 = scalar_lea.sflag [#allocation3], %s473
          %s475 = sand.u32 %s39, 1
          %s476 = smul.addr %s475, 32
          %s477 = scalar_lea.vmem [#allocation2], %s476
          %s478 = smul.u32 8, %s29
          %s480 = ssub.s32 512, 512
          %481 = vsyncadd %s474, %s480
          %s482 = smul.addr %s478, 64
          %s483 = scalar_lea.hbm %s0, %s482
          %s484 = sshll.u32 %s477, 4
          %s485 = int_to_ptr.vmem [resolvable:$true] %s484
          %490 = dma.hbm_to_vmem [thread:$0]  %s483, 512, %s485, %s474, 64, 64, 4
        $region68: #{tpu_custom_call.1} parent=63 // pred_fallthru
          _
        // Predicated region
        $region69: #{tpu_custom_call.1} parent=63 // pred_check
          %p491 = pneg %p75
        $region70: #{tpu_custom_call.1} parent=63 // pred_check_branch
          %493 = sbr.rel (%p491) target = $region72
        $region71: #{tpu_custom_call.1} parent=63 // pred_region
          %p494 = scmp.lt.s32.totalorder %s29, 1
          %s495 = scalar_select %p494, %s29, 1
          %s496 = smul.addr %s495, 8
          %s497 = scalar_lea.vmem %s1, %s496
        $region72: #{tpu_custom_call.1} parent=63 // pred_fallthru
          _
        // Predicated region
        $region73: #{tpu_custom_call.1} parent=63 // pred_check
          %p498 = pneg %p101
        $region74: #{tpu_custom_call.1} parent=63 // pred_check_branch
          %500 = sbr.rel (%p498) target = $region76
        $region75: #{tpu_custom_call.1} parent=63 // pred_region
          %p501 = scmp.lt.s32.totalorder %s29, 1
          %s502 = scalar_select %p501, %s29, 1
          %s503 = smul.addr %s502, 8
          %s504 = scalar_lea.vmem %s2, %s503
        $region76: #{tpu_custom_call.1} parent=63 // pred_fallthru
          _
      $region64: #{tpu_custom_call.1} parent=5 // pred_fallthru
        _
      %p505 = scmp.le.s32.totalorder 1, %s29
      %p506 = scmp.lt.s32.totalorder %s29, 3
      %p507 = pnand %p505, %p506
      %p508 = pneg %p507
      // Predicated region
      $region77: #{tpu_custom_call.1} parent=5 // pred_check
        _
      $region78: #{tpu_custom_call.1} parent=5 // pred_check_branch
        %510 = sbr.rel (%p507) target = $region80
      $region79: #{tpu_custom_call.1} parent=5 // pred_region
        %s511 = ssub.s32 %s29, 1
        %s512 = sand.u32 %s42, 1
        %s513 = scalar_lea.sflag [#allocation3], %s512
        %s514 = sand.u32 %s42, 1
        %s515 = smul.addr %s514, 32
        %s516 = scalar_lea.vmem [#allocation2], %s515
        // Predicated region
        $region81: #{tpu_custom_call.1} parent=79 // pred_check
          %p517 = pneg %p55
        $region82: #{tpu_custom_call.1} parent=79 // pred_check_branch
          %519 = sbr.rel (%p517) target = $region84
        $region83: #{tpu_custom_call.1} parent=79 // pred_region
          %520 = dma.done %s513, 512
        $region84: #{tpu_custom_call.1} parent=79 // pred_fallthru
          _
        // Predicated region
        $region85: #{tpu_custom_call.1} parent=79 // pred_check
          %p521 = pneg %p128
        $region86: #{tpu_custom_call.1} parent=79 // pred_check_branch
          %523 = sbr.rel (%p521) target = $region88
        $region87: #{tpu_custom_call.1} parent=79 // pred_region
          %524 = dma.done [#allocation6], 1024
        $region88: #{tpu_custom_call.1} parent=79 // pred_fallthru
          _
        // Predicated region
        $region89: #{tpu_custom_call.1} parent=79 // pred_check
          %p525 = pneg %p254
        $region90: #{tpu_custom_call.1} parent=79 // pred_check_branch
          %527 = sbr.rel (%p525) target = $region92
        $region91: #{tpu_custom_call.1} parent=79 // pred_region
          %528 = dma.done [#allocation6], 1024
        $region92: #{tpu_custom_call.1} parent=79 // pred_fallthru
          _
        // Predicated region
        $region93: #{tpu_custom_call.1} parent=79 // pred_check
          %p529 = pneg %p338
        $region94: #{tpu_custom_call.1} parent=79 // pred_check_branch
          %531 = sbr.rel (%p529) target = $region96
        $region95: #{tpu_custom_call.1} parent=79 // pred_region
          %532 = dma.done [#allocation9], 1024
        $region96: #{tpu_custom_call.1} parent=79 // pred_fallthru
          _
        %s533 = sand.u32 %s42, 1
        %s534 = scalar_lea.sflag [#allocation3], %s533
        %s535 = sand.u32 %s42, 1
        %s536 = smul.addr %s535, 32
        %s537 = scalar_lea.vmem [#allocation2], %s536
        %p538 = pneg %p55
        %p539 = pneg %p52
        %p540 = scmp.lt.s32.totalorder %s34, 1
        %s541 = scalar_select %p540, %s34, 1
        %s542 = smul.addr %s541, 8
        %s543 = scalar_lea.vmem %s1, %s542
        %p544 = pneg %p81
        %p545 = pneg %p78
        %p546 = scmp.lt.s32.totalorder %s34, 1
        %s547 = scalar_select %p546, %s34, 1
        %s548 = smul.addr %s547, 8
        %s549 = scalar_lea.vmem %s2, %s548
        %p550 = pneg %p107
        %p551 = pneg %p104
        %p552 = pneg %p128
        %p553 = pneg %p125
        %p554 = pneg %p149
        %p555 = pneg %p146
        %p556 = pneg %p170
        %p557 = pneg %p167
        %p558 = pneg %p191
        %p559 = pneg %p188
        %p560 = pneg %p212
        %p561 = pneg %p209
        %p562 = pneg %p233
        %p563 = pneg %p230
        %p564 = pneg %p254
        %p565 = pneg %p251
        %p566 = pneg %p275
        %p567 = pneg %p272
        %p568 = pneg %p296
        %p569 = pneg %p293
        %p570 = pneg %p317
        %p571 = pneg %p314
        %p572 = pneg %p338
        %p573 = pneg %p335
        %p574 = pneg %p359
        %p575 = pneg %p356
        %p576 = pneg %p385
        %p577 = pneg %p382
        %s578 = sand.u32 %s372, 1
        %s579 = scalar_lea.sflag [#allocation4], %s578
        %s580 = sand.u32 %s372, 1
        %s581 = smul.addr %s580, 8
        %s582 = scalar_lea.vmem [#allocation10], %s581
        %s583 = smul.u32 8, %s34
        %p584 = scmp.lt.s32.totalorder %s34, 1
        %s585 = scalar_select %p584, %s34, 1
        %s586 = smul.addr %s585, 8
        %s587 = scalar_lea.vmem %s1, %s586
        %p588 = scmp.lt.s32.totalorder %s34, 1
        %s589 = scalar_select %p588, %s34, 1
        %s590 = smul.addr %s589, 8
        %s591 = scalar_lea.vmem %s2, %s590
        %v593 = vld [vmem:[%s516] sm:$0x1]
        %v594 = vld [vmem:[%s516 + $0x4] sm:$0x1]
        %v595 = vld [vmem:[%s516 + $0x8] sm:$0x1]
        %v596 = vld [vmem:[%s516 + $0xc] sm:$0x1]
        %v597 = vld [vmem:[%s516 + $0x10] sm:$0x1]
        %v598 = vld [vmem:[%s516 + $0x14] sm:$0x1]
        %v599 = vld [vmem:[%s516 + $0x18] sm:$0x1]
        %v600 = vld [vmem:[%s516 + $0x1c] sm:$0x1]
        %v601 = vunpack.c.l.bf16 %v593
        %v602 = vunpack.c.l.bf16 %v594
        %v603 = vunpack.c.l.bf16 %v595
        %v604 = vunpack.c.l.bf16 %v596
        %v605 = vunpack.c.l.bf16 %v597
        %v606 = vunpack.c.l.bf16 %v598
        %v607 = vunpack.c.l.bf16 %v599
        %v608 = vunpack.c.l.bf16 %v600
        %v609 = vld [vmem:[%s587] sm:$0xff]
        %611 = vset.pattern.permute.xlu0 0
        %612 = vperm.xlu0 %611, %v609
        %v613 = vpop.permute.xlu0 %612
        %v614 = vrot.slane %v613, 1
        %v615 = vrot.slane %v613, 2
        %v616 = vrot.slane %v613, 3
        %v617 = vrot.slane %v613, 4
        %v618 = vrot.slane %v613, 5
        %v619 = vrot.slane %v613, 6
        %v620 = vrot.slane %v613, 7
        %v629 = vmul.f32 %v601, %v613
        %v630 = vmul.f32 %v602, %v614
        %v631 = vmul.f32 %v603, %v615
        %v632 = vmul.f32 %v604, %v616
        %v633 = vmul.f32 %v605, %v617
        %v634 = vmul.f32 %v606, %v618
        %v635 = vmul.f32 %v607, %v619
        %v636 = vmul.f32 %v608, %v620
        %v637 = vadd.f32 %v629, 0.0
        %v638 = vadd.f32 %v630, 0.0
        %v639 = vadd.f32 %v631, 0.0
        %v640 = vadd.f32 %v632, 0.0
        %v641 = vadd.f32 %v633, 0.0
        %v642 = vadd.f32 %v634, 0.0
        %v643 = vadd.f32 %v635, 0.0
        %v644 = vadd.f32 %v636, 0.0
        %645 = vset.pattern.permute.xlu0 1
        %646 = vperm.xlu0 %645, %v609
        %v647 = vpop.permute.xlu0 %646
        %v648 = vrot.slane %v647, 7
        %v649 = vrot.slane %v647, 1
        %v650 = vrot.slane %v647, 2
        %v651 = vrot.slane %v647, 3
        %v652 = vrot.slane %v647, 4
        %v653 = vrot.slane %v647, 5
        %v654 = vrot.slane %v647, 6
        %v663 = vmul.f32 %v601, %v648
        %v664 = vmul.f32 %v602, %v647
        %v665 = vmul.f32 %v603, %v649
        %v666 = vmul.f32 %v604, %v650
        %v667 = vmul.f32 %v605, %v651
        %v668 = vmul.f32 %v606, %v652
        %v669 = vmul.f32 %v607, %v653
        %v670 = vmul.f32 %v608, %v654
        %v679 = vrot.slane %v663, 1
        %v680 = vrot.slane %v664, 1
        %v681 = vrot.slane %v665, 1
        %v682 = vrot.slane %v666, 1
        %v683 = vrot.slane %v667, 1
        %v684 = vrot.slane %v668, 1
        %v685 = vrot.slane %v669, 1
        %v686 = vrot.slane %v670, 1
        %v695 = vadd.f32 %v637, %v679
        %v696 = vadd.f32 %v638, %v680
        %v697 = vadd.f32 %v639, %v681
        %v698 = vadd.f32 %v640, %v682
        %v699 = vadd.f32 %v641, %v683
        %v700 = vadd.f32 %v642, %v684
        %v701 = vadd.f32 %v643, %v685
        %v702 = vadd.f32 %v644, %v686
        %v703 = vld [vmem:[%s516] sm:$0x2]
        %v704 = vld [vmem:[%s516 + $0x4] sm:$0x2]
        %v705 = vld [vmem:[%s516 + $0x8] sm:$0x2]
        %v706 = vld [vmem:[%s516 + $0xc] sm:$0x2]
        %v707 = vld [vmem:[%s516 + $0x10] sm:$0x2]
        %v708 = vld [vmem:[%s516 + $0x14] sm:$0x2]
        %v709 = vld [vmem:[%s516 + $0x18] sm:$0x2]
        %v710 = vld [vmem:[%s516 + $0x1c] sm:$0x2]
        %v711 = vunpack.c.l.bf16 %v703
        %v712 = vunpack.c.l.bf16 %v704
        %v713 = vunpack.c.l.bf16 %v705
        %v714 = vunpack.c.l.bf16 %v706
        %v715 = vunpack.c.l.bf16 %v707
        %v716 = vunpack.c.l.bf16 %v708
        %v717 = vunpack.c.l.bf16 %v709
        %v718 = vunpack.c.l.bf16 %v710
        %719 = vset.pattern.permute.xlu0 2
        %720 = vperm.xlu0 %719, %v609
        %v721 = vpop.permute.xlu0 %720
        %v722 = vrot.slane %v721, 6
        %v723 = vrot.slane %v721, 7
        %v724 = vrot.slane %v721, 1
        %v725 = vrot.slane %v721, 2
        %v726 = vrot.slane %v721, 3
        %v727 = vrot.slane %v721, 4
        %v728 = vrot.slane %v721, 5
        %v737 = vmul.f32 %v711, %v722
        %v738 = vmul.f32 %v712, %v723
        %v739 = vmul.f32 %v713, %v721
        %v740 = vmul.f32 %v714, %v724
        %v741 = vmul.f32 %v715, %v725
        %v742 = vmul.f32 %v716, %v726
        %v743 = vmul.f32 %v717, %v727
        %v744 = vmul.f32 %v718, %v728
        %v753 = vrot.slane %v737, 2
        %v754 = vrot.slane %v738, 2
        %v755 = vrot.slane %v739, 2
        %v756 = vrot.slane %v740, 2
        %v757 = vrot.slane %v741, 2
        %v758 = vrot.slane %v742, 2
        %v759 = vrot.slane %v743, 2
        %v760 = vrot.slane %v744, 2
        %v769 = vadd.f32 %v695, %v753
        %v770 = vadd.f32 %v696, %v754
        %v771 = vadd.f32 %v697, %v755
        %v772 = vadd.f32 %v698, %v756
        %v773 = vadd.f32 %v699, %v757
        %v774 = vadd.f32 %v700, %v758
        %v775 = vadd.f32 %v701, %v759
        %v776 = vadd.f32 %v702, %v760
        %777 = vset.pattern.permute.xlu0 3
        %778 = vperm.xlu0 %777, %v609
        %v779 = vpop.permute.xlu0 %778
        %v780 = vrot.slane %v779, 5
        %v781 = vrot.slane %v779, 6
        %v782 = vrot.slane %v779, 7
        %v783 = vrot.slane %v779, 1
        %v784 = vrot.slane %v779, 2
        %v785 = vrot.slane %v779, 3
        %v786 = vrot.slane %v779, 4
        %v795 = vmul.f32 %v711, %v780
        %v796 = vmul.f32 %v712, %v781
        %v797 = vmul.f32 %v713, %v782
        %v798 = vmul.f32 %v714, %v779
        %v799 = vmul.f32 %v715, %v783
        %v800 = vmul.f32 %v716, %v784
        %v801 = vmul.f32 %v717, %v785
        %v802 = vmul.f32 %v718, %v786
        %v811 = vrot.slane %v795, 3
        %v812 = vrot.slane %v796, 3
        %v813 = vrot.slane %v797, 3
        %v814 = vrot.slane %v798, 3
        %v815 = vrot.slane %v799, 3
        %v816 = vrot.slane %v800, 3
        %v817 = vrot.slane %v801, 3
        %v818 = vrot.slane %v802, 3
        %v827 = vadd.f32 %v769, %v811
        %v828 = vadd.f32 %v770, %v812
        %v829 = vadd.f32 %v771, %v813
        %v830 = vadd.f32 %v772, %v814
        %v831 = vadd.f32 %v773, %v815
        %v832 = vadd.f32 %v774, %v816
        %v833 = vadd.f32 %v775, %v817
        %v834 = vadd.f32 %v776, %v818
        %v835 = vld [vmem:[%s516] sm:$0x4]
        %v836 = vld [vmem:[%s516 + $0x4] sm:$0x4]
        %v837 = vld [vmem:[%s516 + $0x8] sm:$0x4]
        %v838 = vld [vmem:[%s516 + $0xc] sm:$0x4]
        %v839 = vld [vmem:[%s516 + $0x10] sm:$0x4]
        %v840 = vld [vmem:[%s516 + $0x14] sm:$0x4]
        %v841 = vld [vmem:[%s516 + $0x18] sm:$0x4]
        %v842 = vld [vmem:[%s516 + $0x1c] sm:$0x4]
        %v843 = vunpack.c.l.bf16 %v835
        %v844 = vunpack.c.l.bf16 %v836
        %v845 = vunpack.c.l.bf16 %v837
        %v846 = vunpack.c.l.bf16 %v838
        %v847 = vunpack.c.l.bf16 %v839
        %v848 = vunpack.c.l.bf16 %v840
        %v849 = vunpack.c.l.bf16 %v841
        %v850 = vunpack.c.l.bf16 %v842
        %851 = vset.pattern.permute.xlu0 4
        %852 = vperm.xlu0 %851, %v609
        %v853 = vpop.permute.xlu0 %852
        %v854 = vrot.slane %v853, 4
        %v855 = vrot.slane %v853, 5
        %v856 = vrot.slane %v853, 6
        %v857 = vrot.slane %v853, 7
        %v858 = vrot.slane %v853, 1
        %v859 = vrot.slane %v853, 2
        %v860 = vrot.slane %v853, 3
        %v869 = vmul.f32 %v843, %v854
        %v870 = vmul.f32 %v844, %v855
        %v871 = vmul.f32 %v845, %v856
        %v872 = vmul.f32 %v846, %v857
        %v873 = vmul.f32 %v847, %v853
        %v874 = vmul.f32 %v848, %v858
        %v875 = vmul.f32 %v849, %v859
        %v876 = vmul.f32 %v850, %v860
        %v885 = vrot.slane %v869, 4
        %v886 = vrot.slane %v870, 4
        %v887 = vrot.slane %v871, 4
        %v888 = vrot.slane %v872, 4
        %v889 = vrot.slane %v873, 4
        %v890 = vrot.slane %v874, 4
        %v891 = vrot.slane %v875, 4
        %v892 = vrot.slane %v876, 4
        %v901 = vadd.f32 %v827, %v885
        %v902 = vadd.f32 %v828, %v886
        %v903 = vadd.f32 %v829, %v887
        %v904 = vadd.f32 %v830, %v888
        %v905 = vadd.f32 %v831, %v889
        %v906 = vadd.f32 %v832, %v890
        %v907 = vadd.f32 %v833, %v891
        %v908 = vadd.f32 %v834, %v892
        %909 = vset.pattern.permute.xlu0 5
        %910 = vperm.xlu0 %909, %v609
        %v911 = vpop.permute.xlu0 %910
        %v912 = vrot.slane %v911, 3
        %v913 = vrot.slane %v911, 4
        %v914 = vrot.slane %v911, 5
        %v915 = vrot.slane %v911, 6
        %v916 = vrot.slane %v911, 7
        %v917 = vrot.slane %v911, 1
        %v918 = vrot.slane %v911, 2
        %v927 = vmul.f32 %v843, %v912
        %v928 = vmul.f32 %v844, %v913
        %v929 = vmul.f32 %v845, %v914
        %v930 = vmul.f32 %v846, %v915
        %v931 = vmul.f32 %v847, %v916
        %v932 = vmul.f32 %v848, %v911
        %v933 = vmul.f32 %v849, %v917
        %v934 = vmul.f32 %v850, %v918
        %v943 = vrot.slane %v927, 5
        %v944 = vrot.slane %v928, 5
        %v945 = vrot.slane %v929, 5
        %v946 = vrot.slane %v930, 5
        %v947 = vrot.slane %v931, 5
        %v948 = vrot.slane %v932, 5
        %v949 = vrot.slane %v933, 5
        %v950 = vrot.slane %v934, 5
        %v959 = vadd.f32 %v901, %v943
        %v960 = vadd.f32 %v902, %v944
        %v961 = vadd.f32 %v903, %v945
        %v962 = vadd.f32 %v904, %v946
        %v963 = vadd.f32 %v905, %v947
        %v964 = vadd.f32 %v906, %v948
        %v965 = vadd.f32 %v907, %v949
        %v966 = vadd.f32 %v908, %v950
        %v967 = vld [vmem:[%s516] sm:$0x8]
        %v968 = vld [vmem:[%s516 + $0x4] sm:$0x8]
        %v969 = vld [vmem:[%s516 + $0x8] sm:$0x8]
        %v970 = vld [vmem:[%s516 + $0xc] sm:$0x8]
        %v971 = vld [vmem:[%s516 + $0x10] sm:$0x8]
        %v972 = vld [vmem:[%s516 + $0x14] sm:$0x8]
        %v973 = vld [vmem:[%s516 + $0x18] sm:$0x8]
        %v974 = vld [vmem:[%s516 + $0x1c] sm:$0x8]
        %v975 = vunpack.c.l.bf16 %v967
        %v976 = vunpack.c.l.bf16 %v968
        %v977 = vunpack.c.l.bf16 %v969
        %v978 = vunpack.c.l.bf16 %v970
        %v979 = vunpack.c.l.bf16 %v971
        %v980 = vunpack.c.l.bf16 %v972
        %v981 = vunpack.c.l.bf16 %v973
        %v982 = vunpack.c.l.bf16 %v974
        %983 = vset.pattern.permute.xlu0 6
        %984 = vperm.xlu0 %983, %v609
        %v985 = vpop.permute.xlu0 %984
        %v986 = vrot.slane %v985, 2
        %v987 = vrot.slane %v985, 3
        %v988 = vrot.slane %v985, 4
        %v989 = vrot.slane %v985, 5
        %v990 = vrot.slane %v985, 6
        %v991 = vrot.slane %v985, 7
        %v992 = vrot.slane %v985, 1
        %v1001 = vmul.f32 %v975, %v986
        %v1002 = vmul.f32 %v976, %v987
        %v1003 = vmul.f32 %v977, %v988
        %v1004 = vmul.f32 %v978, %v989
        %v1005 = vmul.f32 %v979, %v990
        %v1006 = vmul.f32 %v980, %v991
        %v1007 = vmul.f32 %v981, %v985
        %v1008 = vmul.f32 %v982, %v992
        %v1017 = vrot.slane %v1001, 6
        %v1018 = vrot.slane %v1002, 6
        %v1019 = vrot.slane %v1003, 6
        %v1020 = vrot.slane %v1004, 6
        %v1021 = vrot.slane %v1005, 6
        %v1022 = vrot.slane %v1006, 6
        %v1023 = vrot.slane %v1007, 6
        %v1024 = vrot.slane %v1008, 6
        %v1033 = vadd.f32 %v959, %v1017
        %v1034 = vadd.f32 %v960, %v1018
        %v1035 = vadd.f32 %v961, %v1019
        %v1036 = vadd.f32 %v962, %v1020
        %v1037 = vadd.f32 %v963, %v1021
        %v1038 = vadd.f32 %v964, %v1022
        %v1039 = vadd.f32 %v965, %v1023
        %v1040 = vadd.f32 %v966, %v1024
        %1041 = vset.pattern.permute.xlu0 7
        %1042 = vperm.xlu0 %1041, %v609
        %v1043 = vpop.permute.xlu0 %1042
        %v1044 = vrot.slane %v1043, 1
        %v1045 = vrot.slane %v1043, 2
        %v1046 = vrot.slane %v1043, 3
        %v1047 = vrot.slane %v1043, 4
        %v1048 = vrot.slane %v1043, 5
        %v1049 = vrot.slane %v1043, 6
        %v1050 = vrot.slane %v1043, 7
        %v1059 = vmul.f32 %v975, %v1044
        %v1060 = vmul.f32 %v976, %v1045
        %v1061 = vmul.f32 %v977, %v1046
        %v1062 = vmul.f32 %v978, %v1047
        %v1063 = vmul.f32 %v979, %v1048
        %v1064 = vmul.f32 %v980, %v1049
        %v1065 = vmul.f32 %v981, %v1050
        %v1066 = vmul.f32 %v982, %v1043
        %v1075 = vrot.slane %v1059, 7
        %v1076 = vrot.slane %v1060, 7
        %v1077 = vrot.slane %v1061, 7
        %v1078 = vrot.slane %v1062, 7
        %v1079 = vrot.slane %v1063, 7
        %v1080 = vrot.slane %v1064, 7
        %v1081 = vrot.slane %v1065, 7
        %v1082 = vrot.slane %v1066, 7
        %v1091 = vadd.f32 %v1033, %v1075
        %v1092 = vadd.f32 %v1034, %v1076
        %v1093 = vadd.f32 %v1035, %v1077
        %v1094 = vadd.f32 %v1036, %v1078
        %v1095 = vadd.f32 %v1037, %v1079
        %v1096 = vadd.f32 %v1038, %v1080
        %v1097 = vadd.f32 %v1039, %v1081
        %v1098 = vadd.f32 %v1040, %v1082
        %v1099 = vpack.c.bf16 %v1091, %v1091
        %v1100 = vpack.c.bf16 %v1092, %v1092
        %v1101 = vpack.c.bf16 %v1093, %v1093
        %v1102 = vpack.c.bf16 %v1094, %v1094
        %v1103 = vpack.c.bf16 %v1095, %v1095
        %v1104 = vpack.c.bf16 %v1096, %v1096
        %v1105 = vpack.c.bf16 %v1097, %v1097
        %v1106 = vpack.c.bf16 %v1098, %v1098
        %v1107 = vld [vmem:[#allocation5] sm:$0xf]
        %v1108 = vld [vmem:[#allocation5 + $0x4] sm:$0xf]
        %v1109 = vld [vmem:[#allocation5 + $0x8] sm:$0xf]
        %v1110 = vld [vmem:[#allocation5 + $0xc] sm:$0xf]
        %v1111 = vld [vmem:[#allocation5 + $0x10] sm:$0xf]
        %v1112 = vld [vmem:[#allocation5 + $0x14] sm:$0xf]
        %v1113 = vld [vmem:[#allocation5 + $0x18] sm:$0xf]
        %v1114 = vld [vmem:[#allocation5 + $0x1c] sm:$0xf]
        %v1115 = vld [vmem:[#allocation5 + $0x20] sm:$0xf]
        %v1116 = vld [vmem:[#allocation5 + $0x24] sm:$0xf]
        %v1117 = vld [vmem:[#allocation5 + $0x28] sm:$0xf]
        %v1118 = vld [vmem:[#allocation5 + $0x2c] sm:$0xf]
        %v1119 = vld [vmem:[#allocation5 + $0x30] sm:$0xf]
        %v1120 = vld [vmem:[#allocation5 + $0x34] sm:$0xf]
        %v1121 = vld [vmem:[#allocation5 + $0x38] sm:$0xf]
        %v1122 = vld [vmem:[#allocation5 + $0x3c] sm:$0xf]
        %v1123 = vld [vmem:[%s4] sm:$0x1]
        %v1124 = vld [vmem:[%s591] sm:$0xff]
        %v1126 = vlaneseq
        %v1127 = vshrl.u32 %v1126, 7
        %v1128 = vsub.s32 0, %v1127
        %v1129 = vrot.slane %v1123, %v1128
        %1132 = vset.pattern.permute.xlu0 0
        %1133 = vperm.xlu0 %1132, %v1124
        %v1134 = vpop.permute.xlu0 %1133
        %v1136 = vmul.f32 %v1129, %v1134
        %v1145 = vunpack.c.l.b16 %v1099
        %v1146 = vunpack.c.l.b16 %v1100
        %v1147 = vunpack.c.l.b16 %v1101
        %v1148 = vunpack.c.l.b16 %v1102
        %v1149 = vunpack.c.l.b16 %v1103
        %v1150 = vunpack.c.l.b16 %v1104
        %v1151 = vunpack.c.l.b16 %v1105
        %v1152 = vunpack.c.l.b16 %v1106
        %v1153 = vrot.slane %v1146, 7
        %vm1154 = vcmask 1041409
        %v1155 = vsel %vm1154, %v1153, %v1145
        %v1156 = vrot.slane %v1147, 6
        %vm1157 = vcmask 1042434
        %v1158 = vsel %vm1157, %v1156, %v1155
        %v1159 = vrot.slane %v1148, 5
        %vm1160 = vcmask 1043459
        %v1161 = vsel %vm1160, %v1159, %v1158
        %v1162 = vrot.slane %v1149, 4
        %vm1163 = vcmask 1044484
        %v1164 = vsel %vm1163, %v1162, %v1161
        %v1165 = vrot.slane %v1150, 3
        %vm1166 = vcmask 1045509
        %v1167 = vsel %vm1166, %v1165, %v1164
        %v1168 = vrot.slane %v1151, 2
        %vm1169 = vcmask 1046534
        %v1170 = vsel %vm1169, %v1168, %v1167
        %v1171 = vrot.slane %v1152, 1
        %vm1172 = vcmask 1047559
        %v1173 = vsel %vm1172, %v1171, %v1170
        %v1174 = vpack.c.b16 %v1173, %v1173
        %v1192 = vunpack.c.l.b16 %v1107
        %v1193 = vunpack.c.l.b16 %v1108
        %v1194 = vunpack.c.l.b16 %v1109
        %v1195 = vunpack.c.l.b16 %v1110
        %v1196 = vunpack.c.l.b16 %v1111
        %v1197 = vunpack.c.l.b16 %v1112
        %v1198 = vunpack.c.l.b16 %v1113
        %v1199 = vunpack.c.l.b16 %v1114
        %v1200 = vunpack.c.l.b16 %v1115
        %v1201 = vunpack.c.l.b16 %v1116
        %v1202 = vunpack.c.l.b16 %v1117
        %v1203 = vunpack.c.l.b16 %v1118
        %v1204 = vunpack.c.l.b16 %v1119
        %v1205 = vunpack.c.l.b16 %v1120
        %v1206 = vunpack.c.l.b16 %v1121
        %v1207 = vunpack.c.l.b16 %v1122
        %v1208 = vpack.c.b16 %v1193, %v1192
        %v1209 = vpack.c.b16 %v1195, %v1194
        %v1210 = vpack.c.b16 %v1197, %v1196
        %v1211 = vpack.c.b16 %v1199, %v1198
        %v1212 = vpack.c.b16 %v1201, %v1200
        %v1213 = vpack.c.b16 %v1203, %v1202
        %v1214 = vpack.c.b16 %v1205, %v1204
        %v1215 = vpack.c.b16 %v1207, %v1206
        %1224 = vmatprep.subr.bf16.mxu0 0
        %1225 = vmatpush1.bf16.msra.mxu0 %v1208
        %1226 = vmatprep.subr.bf16.mxu0 0
        %1227 = vmatpush1.bf16.msra.mxu0 %v1209
        %1228 = vmatprep.subr.bf16.mxu0 0
        %1229 = vmatpush1.bf16.msra.mxu0 %v1210
        %1230 = vmatprep.subr.bf16.mxu0 0
        %1231 = vmatpush1.bf16.msra.mxu0 %v1211
        %1232 = vmatprep.subr.bf16.mxu0 0
        %1233 = vmatpush1.bf16.msra.mxu0 %v1212
        %1234 = vmatprep.subr.bf16.mxu0 0
        %1235 = vmatpush1.bf16.msra.mxu0 %v1213
        %1236 = vmatprep.subr.bf16.mxu0 0
        %1237 = vmatpush1.bf16.msra.mxu0 %v1214
        %1238 = vmatprep.subr.bf16.mxu0 0
        %1239 = vmatpush1.bf16.msra.mxu0 %v1215
        %1240 = vmatprep.subr.bf16.mxu0 0
        %1241 = vmatpush1.bf16.msra.mxu0 0
        %1242 = vmatprep.subr.bf16.mxu0 0
        %1243 = vmatpush1.bf16.msra.mxu0 0
        %1244 = vmatprep.subr.bf16.mxu0 0
        %1245 = vmatpush1.bf16.msra.mxu0 0
        %1246 = vmatprep.subr.bf16.mxu0 0
        %1247 = vmatpush1.bf16.msra.mxu0 0
        %1248 = vmatprep.subr.bf16.mxu0 0
        %1249 = vmatpush1.bf16.msra.mxu0 0
        %1250 = vmatprep.subr.bf16.mxu0 0
        %1251 = vmatpush1.bf16.msra.mxu0 0
        %1252 = vmatprep.subr.bf16.mxu0 0
        %1253 = vmatpush1.bf16.msra.mxu0 0
        %1254 = vmatprep.subr.bf16.mxu0 0
        %1255 = vmatpush1.bf16.msra.mxu0 0
        %1256 = vmatprep.mubr.bf16.mxu0 0
        %1257 = vmatmul.mubr.bf16.gmra.mrb[0].mxu0 %v1174
        %v1258 = vpop.f32.mrb[0].mxu0
        %v1259 = vadd.f32 %v1136, %v1258
        %v1260 = vpop.f32.mrb[0].mxu0
        %v1261 = vpop.f32.mrb[0].mxu0
        %v1262 = vpop.f32.mrb[0].mxu0
        %1263 = vdwg.mxu0
        %v1264 = vld [vmem:[%s5] sm:$0x1]
        %v1265 = vld [vmem:[%s6] sm:$0x1]
        %1266 = vadd.xlane.f32.xlu0 %v1259
        %v1267 = vpop.xlane.xlu0 %1266
        %v1268 = vrcp.pop 128.0
        %v1269 = vmul.f32 %v1267, %v1268
        %v1270 = vsub.f32 %v1259, %v1269
        %v1271 = vmul.f32 %v1270, %v1270
        %1272 = vadd.xlane.f32.xlu0 %v1271
        %v1273 = vpop.xlane.xlu0 %1272
        %v1274 = vmul.f32 %v1273, %v1268
        %v1275 = vadd.f32 %v1274, 1e-05
        %v1276 = vrsqrt.pop %v1275
        %v1277 = vmul.f32 %v1270, %v1276
        %v1279 = vlaneseq
        %v1280 = vshrl.u32 %v1279, 7
        %v1281 = vsub.s32 0, %v1280
        %v1282 = vrot.slane %v1264, %v1281
        %v1284 = vmul.f32 %v1277, %v1282
        %v1286 = vlaneseq
        %v1287 = vshrl.u32 %v1286, 7
        %v1288 = vsub.s32 0, %v1287
        %v1289 = vrot.slane %v1265, %v1288
        %v1291 = vadd.f32 %v1284, %v1289
        %v1292 = vpack.c.bf16 %v1291, %v1291
        %v1293 = vld [vmem:[%s7] sm:$0xf]
        %v1294 = vld [vmem:[%s7 + $0x4] sm:$0xf]
        %v1295 = vld [vmem:[%s7 + $0x8] sm:$0xf]
        %v1296 = vld [vmem:[%s7 + $0xc] sm:$0xf]
        %v1297 = vld [vmem:[%s7 + $0x10] sm:$0xf]
        %v1298 = vld [vmem:[%s7 + $0x14] sm:$0xf]
        %v1299 = vld [vmem:[%s7 + $0x18] sm:$0xf]
        %v1300 = vld [vmem:[%s7 + $0x1c] sm:$0xf]
        %v1301 = vld [vmem:[%s7 + $0x20] sm:$0xf]
        %v1302 = vld [vmem:[%s7 + $0x24] sm:$0xf]
        %v1303 = vld [vmem:[%s7 + $0x28] sm:$0xf]
        %v1304 = vld [vmem:[%s7 + $0x2c] sm:$0xf]
        %v1305 = vld [vmem:[%s7 + $0x30] sm:$0xf]
        %v1306 = vld [vmem:[%s7 + $0x34] sm:$0xf]
        %v1307 = vld [vmem:[%s7 + $0x38] sm:$0xf]
        %v1308 = vld [vmem:[%s7 + $0x3c] sm:$0xf]
        %v1309 = vld [vmem:[%s8] sm:$0x1]
        %v1311 = vlaneseq
        %v1312 = vshrl.u32 %v1311, 7
        %v1313 = vsub.s32 0, %v1312
        %v1314 = vrot.slane %v1309, %v1313
        %v1332 = vunpack.c.l.b16 %v1293
        %v1333 = vunpack.c.l.b16 %v1294
        %v1334 = vunpack.c.l.b16 %v1295
        %v1335 = vunpack.c.l.b16 %v1296
        %v1336 = vunpack.c.l.b16 %v1297
        %v1337 = vunpack.c.l.b16 %v1298
        %v1338 = vunpack.c.l.b16 %v1299
        %v1339 = vunpack.c.l.b16 %v1300
        %v1340 = vunpack.c.l.b16 %v1301
        %v1341 = vunpack.c.l.b16 %v1302
        %v1342 = vunpack.c.l.b16 %v1303
        %v1343 = vunpack.c.l.b16 %v1304
        %v1344 = vunpack.c.l.b16 %v1305
        %v1345 = vunpack.c.l.b16 %v1306
        %v1346 = vunpack.c.l.b16 %v1307
        %v1347 = vunpack.c.l.b16 %v1308
        %v1348 = vpack.c.b16 %v1333, %v1332
        %v1349 = vpack.c.b16 %v1335, %v1334
        %v1350 = vpack.c.b16 %v1337, %v1336
        %v1351 = vpack.c.b16 %v1339, %v1338
        %v1352 = vpack.c.b16 %v1341, %v1340
        %v1353 = vpack.c.b16 %v1343, %v1342
        %v1354 = vpack.c.b16 %v1345, %v1344
        %v1355 = vpack.c.b16 %v1347, %v1346
        %1364 = vmatprep.subr.bf16.mxu0 0
        %1365 = vmatpush1.bf16.msra.mxu0 %v1348
        %1366 = vmatprep.subr.bf16.mxu0 0
        %1367 = vmatpush1.bf16.msra.mxu0 %v1349
        %1368 = vmatprep.subr.bf16.mxu0 0
        %1369 = vmatpush1.bf16.msra.mxu0 %v1350
        %1370 = vmatprep.subr.bf16.mxu0 0
        %1371 = vmatpush1.bf16.msra.mxu0 %v1351
        %1372 = vmatprep.subr.bf16.mxu0 0
        %1373 = vmatpush1.bf16.msra.mxu0 %v1352
        %1374 = vmatprep.subr.bf16.mxu0 0
        %1375 = vmatpush1.bf16.msra.mxu0 %v1353
        %1376 = vmatprep.subr.bf16.mxu0 0
        %1377 = vmatpush1.bf16.msra.mxu0 %v1354
        %1378 = vmatprep.subr.bf16.mxu0 0
        %1379 = vmatpush1.bf16.msra.mxu0 %v1355
        %1380 = vmatprep.subr.bf16.mxu0 0
        %1381 = vmatpush1.bf16.msra.mxu0 0
        %1382 = vmatprep.subr.bf16.mxu0 0
        %1383 = vmatpush1.bf16.msra.mxu0 0
        %1384 = vmatprep.subr.bf16.mxu0 0
        %1385 = vmatpush1.bf16.msra.mxu0 0
        %1386 = vmatprep.subr.bf16.mxu0 0
        %1387 = vmatpush1.bf16.msra.mxu0 0
        %1388 = vmatprep.subr.bf16.mxu0 0
        %1389 = vmatpush1.bf16.msra.mxu0 0
        %1390 = vmatprep.subr.bf16.mxu0 0
        %1391 = vmatpush1.bf16.msra.mxu0 0
        %1392 = vmatprep.subr.bf16.mxu0 0
        %1393 = vmatpush1.bf16.msra.mxu0 0
        %1394 = vmatprep.subr.bf16.mxu0 0
        %1395 = vmatpush1.bf16.msra.mxu0 0
        %1396 = vmatprep.mubr.bf16.mxu0 0
        %1397 = vmatmul.mubr.bf16.gmra.mrb[0].mxu0 %v1292
        %v1398 = vpop.f32.mrb[0].mxu0
        %v1399 = vadd.f32 %v1314, %v1398
        %v1400 = vpop.f32.mrb[0].mxu0
        %v1401 = vpop.f32.mrb[0].mxu0
        %v1402 = vpop.f32.mrb[0].mxu0
        %1403 = vdwg.mxu0
        %v1404 = vmax.f32 %v1399, 0.0
        %v1405 = vpack.c.bf16 %v1404, %v1404
        %v1406 = vld [vmem:[#allocation7] sm:$0xf]
        %v1407 = vld [vmem:[#allocation7 + $0x4] sm:$0xf]
        %v1408 = vld [vmem:[#allocation7 + $0x8] sm:$0xf]
        %v1409 = vld [vmem:[#allocation7 + $0xc] sm:$0xf]
        %v1410 = vld [vmem:[#allocation7 + $0x10] sm:$0xf]
        %v1411 = vld [vmem:[#allocation7 + $0x14] sm:$0xf]
        %v1412 = vld [vmem:[#allocation7 + $0x18] sm:$0xf]
        %v1413 = vld [vmem:[#allocation7 + $0x1c] sm:$0xf]
        %v1414 = vld [vmem:[#allocation7 + $0x20] sm:$0xf]
        %v1415 = vld [vmem:[#allocation7 + $0x24] sm:$0xf]
        %v1416 = vld [vmem:[#allocation7 + $0x28] sm:$0xf]
        %v1417 = vld [vmem:[#allocation7 + $0x2c] sm:$0xf]
        %v1418 = vld [vmem:[#allocation7 + $0x30] sm:$0xf]
        %v1419 = vld [vmem:[#allocation7 + $0x34] sm:$0xf]
        %v1420 = vld [vmem:[#allocation7 + $0x38] sm:$0xf]
        %v1421 = vld [vmem:[#allocation7 + $0x3c] sm:$0xf]
        %v1422 = vld [vmem:[%s10] sm:$0x1]
        %v1424 = vlaneseq
        %v1425 = vshrl.u32 %v1424, 7
        %v1426 = vsub.s32 0, %v1425
        %v1427 = vrot.slane %v1422, %v1426
        %v1445 = vunpack.c.l.b16 %v1406
        %v1446 = vunpack.c.l.b16 %v1407
        %v1447 = vunpack.c.l.b16 %v1408
        %v1448 = vunpack.c.l.b16 %v1409
        %v1449 = vunpack.c.l.b16 %v1410
        %v1450 = vunpack.c.l.b16 %v1411
        %v1451 = vunpack.c.l.b16 %v1412
        %v1452 = vunpack.c.l.b16 %v1413
        %v1453 = vunpack.c.l.b16 %v1414
        %v1454 = vunpack.c.l.b16 %v1415
        %v1455 = vunpack.c.l.b16 %v1416
        %v1456 = vunpack.c.l.b16 %v1417
        %v1457 = vunpack.c.l.b16 %v1418
        %v1458 = vunpack.c.l.b16 %v1419
        %v1459 = vunpack.c.l.b16 %v1420
        %v1460 = vunpack.c.l.b16 %v1421
        %v1461 = vpack.c.b16 %v1446, %v1445
        %v1462 = vpack.c.b16 %v1448, %v1447
        %v1463 = vpack.c.b16 %v1450, %v1449
        %v1464 = vpack.c.b16 %v1452, %v1451
        %v1465 = vpack.c.b16 %v1454, %v1453
        %v1466 = vpack.c.b16 %v1456, %v1455
        %v1467 = vpack.c.b16 %v1458, %v1457
        %v1468 = vpack.c.b16 %v1460, %v1459
        %1477 = vmatprep.subr.bf16.mxu0 0
        %1478 = vmatpush1.bf16.msra.mxu0 %v1461
        %1479 = vmatprep.subr.bf16.mxu0 0
        %1480 = vmatpush1.bf16.msra.mxu0 %v1462
        %1481 = vmatprep.subr.bf16.mxu0 0
        %1482 = vmatpush1.bf16.msra.mxu0 %v1463
        %1483 = vmatprep.subr.bf16.mxu0 0
        %1484 = vmatpush1.bf16.msra.mxu0 %v1464
        %1485 = vmatprep.subr.bf16.mxu0 0
        %1486 = vmatpush1.bf16.msra.mxu0 %v1465
        %1487 = vmatprep.subr.bf16.mxu0 0
        %1488 = vmatpush1.bf16.msra.mxu0 %v1466
        %1489 = vmatprep.subr.bf16.mxu0 0
        %1490 = vmatpush1.bf16.msra.mxu0 %v1467
        %1491 = vmatprep.subr.bf16.mxu0 0
        %1492 = vmatpush1.bf16.msra.mxu0 %v1468
        %1493 = vmatprep.subr.bf16.mxu0 0
        %1494 = vmatpush1.bf16.msra.mxu0 0
        %1495 = vmatprep.subr.bf16.mxu0 0
        %1496 = vmatpush1.bf16.msra.mxu0 0
        %1497 = vmatprep.subr.bf16.mxu0 0
        %1498 = vmatpush1.bf16.msra.mxu0 0
        %1499 = vmatprep.subr.bf16.mxu0 0
        %1500 = vmatpush1.bf16.msra.mxu0 0
        %1501 = vmatprep.subr.bf16.mxu0 0
        %1502 = vmatpush1.bf16.msra.mxu0 0
        %1503 = vmatprep.subr.bf16.mxu0 0
        %1504 = vmatpush1.bf16.msra.mxu0 0
        %1505 = vmatprep.subr.bf16.mxu0 0
        %1506 = vmatpush1.bf16.msra.mxu0 0
        %1507 = vmatprep.subr.bf16.mxu0 0
        %1508 = vmatpush1.bf16.msra.mxu0 0
        %1509 = vmatprep.mubr.bf16.mxu0 0
        %1510 = vmatmul.mubr.bf16.gmra.mrb[0].mxu0 %v1405
        %v1511 = vpop.f32.mrb[0].mxu0
        %v1512 = vadd.f32 %v1427, %v1511
        %v1513 = vpop.f32.mrb[0].mxu0
        %v1514 = vpop.f32.mrb[0].mxu0
        %v1515 = vpop.f32.mrb[0].mxu0
        %1516 = vdwg.mxu0
        %v1517 = vld [vmem:[%s11] sm:$0x1]
        %v1518 = vld [vmem:[%s12] sm:$0x1]
        %1519 = vadd.xlane.f32.xlu0 %v1512
        %v1520 = vpop.xlane.xlu0 %1519
        %v1521 = vmul.f32 %v1520, %v1268
        %v1522 = vsub.f32 %v1512, %v1521
        %v1523 = vmul.f32 %v1522, %v1522
        %1524 = vadd.xlane.f32.xlu0 %v1523
        %v1525 = vpop.xlane.xlu0 %1524
        %v1526 = vmul.f32 %v1525, %v1268
        %v1527 = vadd.f32 %v1526, 1e-05
        %v1528 = vrsqrt.pop %v1527
        %v1529 = vmul.f32 %v1522, %v1528
        %v1531 = vlaneseq
        %v1532 = vshrl.u32 %v1531, 7
        %v1533 = vsub.s32 0, %v1532
        %v1534 = vrot.slane %v1517, %v1533
        %v1536 = vmul.f32 %v1529, %v1534
        %v1538 = vlaneseq
        %v1539 = vshrl.u32 %v1538, 7
        %v1540 = vsub.s32 0, %v1539
        %v1541 = vrot.slane %v1518, %v1540
        %v1543 = vadd.f32 %v1536, %v1541
        %v1544 = vpack.c.bf16 %v1543, %v1543
        %v1545 = vld [vmem:[#allocation8] sm:$0xf]
        %v1546 = vld [vmem:[#allocation8 + $0x4] sm:$0xf]
        %v1547 = vld [vmem:[#allocation8 + $0x8] sm:$0xf]
        %v1548 = vld [vmem:[#allocation8 + $0xc] sm:$0xf]
        %v1549 = vld [vmem:[#allocation8 + $0x10] sm:$0xf]
        %v1550 = vld [vmem:[#allocation8 + $0x14] sm:$0xf]
        %v1551 = vld [vmem:[#allocation8 + $0x18] sm:$0xf]
        %v1552 = vld [vmem:[#allocation8 + $0x1c] sm:$0xf]
        %v1553 = vld [vmem:[#allocation8 + $0x20] sm:$0xf]
        %v1554 = vld [vmem:[#allocation8 + $0x24] sm:$0xf]
        %v1555 = vld [vmem:[#allocation8 + $0x28] sm:$0xf]
        %v1556 = vld [vmem:[#allocation8 + $0x2c] sm:$0xf]
        %v1557 = vld [vmem:[#allocation8 + $0x30] sm:$0xf]
        %v1558 = vld [vmem:[#allocation8 + $0x34] sm:$0xf]
        %v1559 = vld [vmem:[#allocation8 + $0x38] sm:$0xf]
        %v1560 = vld [vmem:[#allocation8 + $0x3c] sm:$0xf]
        %v1561 = vld [vmem:[%s14] sm:$0x1]
        %v1563 = vlaneseq
        %v1564 = vshrl.u32 %v1563, 7
        %v1565 = vsub.s32 0, %v1564
        %v1566 = vrot.slane %v1561, %v1565
        %v1584 = vunpack.c.l.b16 %v1545
        %v1585 = vunpack.c.l.b16 %v1546
        %v1586 = vunpack.c.l.b16 %v1547
        %v1587 = vunpack.c.l.b16 %v1548
        %v1588 = vunpack.c.l.b16 %v1549
        %v1589 = vunpack.c.l.b16 %v1550
        %v1590 = vunpack.c.l.b16 %v1551
        %v1591 = vunpack.c.l.b16 %v1552
        %v1592 = vunpack.c.l.b16 %v1553
        %v1593 = vunpack.c.l.b16 %v1554
        %v1594 = vunpack.c.l.b16 %v1555
        %v1595 = vunpack.c.l.b16 %v1556
        %v1596 = vunpack.c.l.b16 %v1557
        %v1597 = vunpack.c.l.b16 %v1558
        %v1598 = vunpack.c.l.b16 %v1559
        %v1599 = vunpack.c.l.b16 %v1560
        %v1600 = vpack.c.b16 %v1585, %v1584
        %v1601 = vpack.c.b16 %v1587, %v1586
        %v1602 = vpack.c.b16 %v1589, %v1588
        %v1603 = vpack.c.b16 %v1591, %v1590
        %v1604 = vpack.c.b16 %v1593, %v1592
        %v1605 = vpack.c.b16 %v1595, %v1594
        %v1606 = vpack.c.b16 %v1597, %v1596
        %v1607 = vpack.c.b16 %v1599, %v1598
        %1616 = vmatprep.subr.bf16.mxu0 0
        %1617 = vmatpush1.bf16.msra.mxu0 %v1600
        %1618 = vmatprep.subr.bf16.mxu0 0
        %1619 = vmatpush1.bf16.msra.mxu0 %v1601
        %1620 = vmatprep.subr.bf16.mxu0 0
        %1621 = vmatpush1.bf16.msra.mxu0 %v1602
        %1622 = vmatprep.subr.bf16.mxu0 0
        %1623 = vmatpush1.bf16.msra.mxu0 %v1603
        %1624 = vmatprep.subr.bf16.mxu0 0
        %1625 = vmatpush1.bf16.msra.mxu0 %v1604
        %1626 = vmatprep.subr.bf16.mxu0 0
        %1627 = vmatpush1.bf16.msra.mxu0 %v1605
        %1628 = vmatprep.subr.bf16.mxu0 0
        %1629 = vmatpush1.bf16.msra.mxu0 %v1606
        %1630 = vmatprep.subr.bf16.mxu0 0
        %1631 = vmatpush1.bf16.msra.mxu0 %v1607
        %1632 = vmatprep.subr.bf16.mxu0 0
        %1633 = vmatpush1.bf16.msra.mxu0 0
        %1634 = vmatprep.subr.bf16.mxu0 0
        %1635 = vmatpush1.bf16.msra.mxu0 0
        %1636 = vmatprep.subr.bf16.mxu0 0
        %1637 = vmatpush1.bf16.msra.mxu0 0
        %1638 = vmatprep.subr.bf16.mxu0 0
        %1639 = vmatpush1.bf16.msra.mxu0 0
        %1640 = vmatprep.subr.bf16.mxu0 0
        %1641 = vmatpush1.bf16.msra.mxu0 0
        %1642 = vmatprep.subr.bf16.mxu0 0
        %1643 = vmatpush1.bf16.msra.mxu0 0
        %1644 = vmatprep.subr.bf16.mxu0 0
        %1645 = vmatpush1.bf16.msra.mxu0 0
        %1646 = vmatprep.subr.bf16.mxu0 0
        %1647 = vmatpush1.bf16.msra.mxu0 0
        %1648 = vmatprep.mubr.bf16.mxu0 0
        %1649 = vmatmul.mubr.bf16.gmra.mrb[0].mxu0 %v1544
        %v1650 = vpop.f32.mrb[0].mxu0
        %v1651 = vadd.f32 %v1566, %v1650
        %v1652 = vpop.f32.mrb[0].mxu0
        %v1653 = vpop.f32.mrb[0].mxu0
        %v1654 = vpop.f32.mrb[0].mxu0
        %1655 = vdwg.mxu0
        %1656 = vst [vmem:[%s582] sm:$0xff] %v1651
        %s1657 = sand.u32 %s372, 1
        %s1658 = scalar_lea.sflag [#allocation4], %s1657
        %s1659 = sand.u32 %s372, 1
        %s1660 = smul.addr %s1659, 8
        %s1661 = scalar_lea.vmem [#allocation10], %s1660
        // Predicated region
        $region97: #{tpu_custom_call.1} parent=79 // pred_check
          %p1662 = pneg %p382
        $region98: #{tpu_custom_call.1} parent=79 // pred_check_branch
          %1664 = sbr.rel (%p1662) target = $region100
        $region99: #{tpu_custom_call.1} parent=79 // pred_region
          %s1666 = ssub.s32 128, 128
          %1667 = vsyncadd %s1658, %s1666
          %s1668 = smul.addr %s34, 128
          %s1669 = scalar_lea.hbm %s15, %s1668
          %s1671 = sshll.u32 %s1661, 4
          %s1672 = int_to_ptr.vmem [resolvable:$true] %s1671
          %1674 = dma.vmem_to_hbm [thread:$0]  %s1672, 128, %s1669, %s1658
        $region100: #{tpu_custom_call.1} parent=79 // pred_fallthru
          _
      $region80: #{tpu_custom_call.1} parent=5 // pred_fallthru
        _
      %p1675 = scmp.le.s32.totalorder 2, %s29
      // Predicated region
      $region101: #{tpu_custom_call.1} parent=5 // pred_check
        %p1676 = pneg %p1675
      $region102: #{tpu_custom_call.1} parent=5 // pred_check_branch
        %1678 = sbr.rel (%p1676) target = $region104
      $region103: #{tpu_custom_call.1} parent=5 // pred_region
        %s1679 = ssub.s32 %s29, 2
        // Predicated region
        $region105: #{tpu_custom_call.1} parent=103 // pred_check
          %p1680 = pneg %p388
        $region106: #{tpu_custom_call.1} parent=103 // pred_check_branch
          %1682 = sbr.rel (%p1680) target = $region108
        $region107: #{tpu_custom_call.1} parent=103 // pred_region
          %s1683 = sand.u32 %s373, 1
          %s1684 = scalar_lea.sflag [#allocation4], %s1683
          %s1685 = sand.u32 %s373, 1
          %s1686 = smul.addr %s1685, 8
          %s1687 = scalar_lea.vmem [#allocation10], %s1686
          %1688 = dma.done %s1684, 128
        $region108: #{tpu_custom_call.1} parent=103 // pred_fallthru
          _
      $region104: #{tpu_custom_call.1} parent=5 // pred_fallthru
        _
    $region6: #{tpu_custom_call.1} parent=1 // loop_footer
      %s33 = sadd.s32 1, %s29
    $region7: #{tpu_custom_call.1} parent=1 // loop_footer_branch
      %28 = sbr.rel target = $region3
    $region8: #{tpu_custom_call.1} parent=1 // loop_exit
      _
    %1689 = vsyncpa [#allocation3], 1
    %s1690 = scalar_lea.sflag [#allocation3], 1
    %1691 = vsyncpa %s1690, 1
    %1692 = vsyncpa [#allocation6], 1
    %1693 = vsyncpa [#allocation9], 1
    %1694 = vsyncpa [#allocation4], 1
    %s1695 = scalar_lea.sflag [#allocation4], 1
    %1696 = vsyncpa %s1695, 1

</llo_original>
